<compile_context>
chip_gen: v7x
topology: tpu7x:2x2x1
jax: 0.10.0
libtpu: 0.0.40
codegen_flags: <defaults>
</compile_context>

<pallas_src>
import functools

import jax
import jax.numpy as jnp
from jax.experimental import pallas as pl
from jax.experimental.pallas import tpu as pltpu

EPS = 1e-5                      # nn.LayerNorm default eps
_INV_SQRT2 = 0.7071067811865476
_SQRT_2_OVER_PI = 0.7978845608028654


def _gelu_erf(x):
    # PyTorch nn.GELU() default (exact, erf-based).
    return 0.5 * x * (1.0 + jax.lax.erf(x * _INV_SQRT2))


def _gelu_tanh(x):
    # tanh approximation: goes through the EUP slot instead of VALU polynomials.
    return 0.5 * x * (1.0 + jnp.tanh(_SQRT_2_OVER_PI * (x + 0.044715 * x * x * x)))


def mixer_kernel(x_ref,
                 g1_ref, be1_ref,          # LayerNorm 1 (over D)
                 w1aT_ref, b1a_ref,        # mlp1 Linear(N -> N_out), transposed, bf16
                 w1bT_ref, b1b_ref,        # mlp1 Linear(N_out -> N_out), transposed, bf16
                 g2_ref, be2_ref,          # LayerNorm 2 (over D)
                 w2a_ref, b2a_ref,         # mlp2 Linear(D -> D_out), bf16
                 w2b_ref, b2b_ref,         # mlp2 Linear(D_out -> D_out), bf16
                 o_ref,
                 *, tb, d_in, n_out):
    mm_dtype = w1aT_ref.dtype              # bfloat16 (MXU input dtype)

    xw = x_ref[...]                        # (N, TB*D) f32; lane group t holds batch t
    g1 = g1_ref[...]
    be1 = be1_ref[...]

    # ---- LayerNorm 1 over channels D, per (token, batch) lane-group ----
    xn_chunks = []
    for t in range(tb):                    # tb is small & static -> unrolled
        c = xw[:, t * d_in:(t + 1) * d_in]                       # (N, D)
        mu = jnp.mean(c, axis=-1, keepdims=True)
        var = jnp.mean(jnp.square(c - mu), axis=-1, keepdims=True)
        cn = (c - mu) * jax.lax.rsqrt(var + EPS)
        xn_chunks.append(cn * g1 + be1)
    xn = jnp.concatenate(xn_chunks, axis=1)                      # (N, TB*D)

    # ---- mlp1 (token mixing): (N_out, N) @ (N, TB*D), lane-dense free dim ----
    h = jnp.dot(w1aT_ref[...], xn.astype(mm_dtype),
                preferred_element_type=jnp.float32) + b1a_ref[...]
    h = _gelu_erf(h)        # exact GELU here: its error would be amplified by ln2
    h = jnp.dot(w1bT_ref[...], h.astype(mm_dtype),
                preferred_element_type=jnp.float32) + b1b_ref[...]   # (N_out, TB*D)

    # ---- LayerNorm 2 over D + layout switch to rows = (batch, token_out) ----
    g2 = g2_ref[...]
    be2 = be2_ref[...]
    hn_rows = []
    for t in range(tb):
        c = h[:, t * d_in:(t + 1) * d_in]                        # (N_out, D)
        mu = jnp.mean(c, axis=-1, keepdims=True)
        var = jnp.mean(jnp.square(c - mu), axis=-1, keepdims=True)
        cn = (c - mu) * jax.lax.rsqrt(var + EPS)
        hn_rows.append(cn * g2 + be2)
    hn = jnp.concatenate(hn_rows, axis=0)                        # (TB*N_out, D)

    # ---- mlp2 (channel mixing): (TB*N_out, D) @ (D, D_out) ----
    y = jnp.dot(hn.astype(mm_dtype), w2a_ref[...],
                preferred_element_type=jnp.float32) + b2a_ref[...]
    y = _gelu_tanh(y)       # EUP tanh-GELU; no LayerNorm follows, deviation tiny
    y = jnp.dot(y.astype(mm_dtype), w2b_ref[...],
                preferred_element_type=jnp.float32) + b2b_ref[...]   # (TB*N_out, D_out)

    # ---- lane-dense store: rearrange to (N_out, TB*D_out) via static slices ----
    out = jnp.concatenate([y[t * n_out:(t + 1) * n_out, :] for t in range(tb)],
                          axis=1)                                # (N_out, TB*D_out)
    o_ref[...] = out.astype(o_ref.dtype)


def _pick_tb(B, D, D_out, max_tb=None):
    """Largest batch fold TB such that lane dims are multiples of 128 and grid >= 2."""
    if max_tb is None:
        max_tb = max(1, B // 2)     # keep >= 2 grid steps when possible (v7x: 2 TCs)
    best = None
    for tb in range(1, min(B, max_tb) + 1):
        if B % tb == 0 and (tb * D) % 128 == 0 and (tb * D_out) % 128 == 0:
            best = tb
    if best is None:
        best = B                    # full-batch block: block dims == array dims (legal)
    return best


def mixer_layer(x, params, *, max_tb=None):
    """x: (B, N, D) float32 -> (B, N_out, D_out) float32."""
    (g1, be1, w1a, b1a, w1b, b1b, g2, be2, w2a, b2a, w2b, b2b) = params
    B, N, D = x.shape
    N_out = w1a.shape[1]
    D_out = w2a.shape[1]

    tb = _pick_tb(B, D, D_out, max_tb)
    grid = (B // tb,)

    # Wrapper-side layout plumbing: token mixing wants lanes = (batch, channel).
    x2 = jnp.transpose(x, (1, 0, 2)).reshape(N, B * D)           # (N, B*D)

    mm_dtype = jnp.bfloat16
    args = (
        g1.reshape(1, D).astype(jnp.float32), be1.reshape(1, D).astype(jnp.float32),
        w1a.T.astype(mm_dtype), b1a.reshape(N_out, 1).astype(jnp.float32),
        w1b.T.astype(mm_dtype), b1b.reshape(N_out, 1).astype(jnp.float32),
        g2.reshape(1, D).astype(jnp.float32), be2.reshape(1, D).astype(jnp.float32),
        w2a.astype(mm_dtype), b2a.reshape(1, D_out).astype(jnp.float32),
        w2b.astype(mm_dtype), b2b.reshape(1, D_out).astype(jnp.float32),
    )

    def const_spec(a):
        nd = a.ndim
        # Constant block index across the grid -> Pallas skips redundant re-fetches.
        return pl.BlockSpec(a.shape, lambda i, _nd=nd: (0,) * _nd)

    in_specs = [pl.BlockSpec((N, tb * D), lambda i: (0, i))] + [const_spec(a) for a in args]
    out_spec = pl.BlockSpec((N_out, tb * D_out), lambda i: (0, i))

    kernel = functools.partial(mixer_kernel, tb=tb, d_in=D, n_out=N_out)

    out2 = pl.pallas_call(
        kernel,
        out_shape=jax.ShapeDtypeStruct((N_out, B * D_out), x.dtype),
        grid_spec=pltpu.PrefetchScalarGridSpec(
            num_scalar_prefetch=0,
            grid=grid,
            in_specs=in_specs,
            out_specs=out_spec,
        ),
        compiler_params=pltpu.CompilerParams(dimension_semantics=("parallel",)),
    )(x2, *args)

    # (N_out, B*D_out) -> (B, N_out, D_out): pure layout plumbing in the wrapper.
    return out2.reshape(N_out, B, D_out).transpose(1, 0, 2)


def mixer_ref(x, params, *, matmul_dtype=None, gelu2_tanh=False):
    """Pure-JAX reference of the PyTorch forward.

    Defaults (matmul_dtype=None, gelu2_tanh=False) match fp32 PyTorch exactly.
    With matmul_dtype=jnp.bfloat16 and gelu2_tanh=True it mirrors the kernel's
    mixed-precision policy for a tight numerical check.
    """
    g1, be1, w1a, b1a, w1b, b1b, g2, be2, w2a, b2a, w2b, b2b = params

    def ln(t, g, b):
        mu = t.mean(-1, keepdims=True)
        var = ((t - mu) ** 2).mean(-1, keepdims=True)
        return (t - mu) * jax.lax.rsqrt(var + EPS) * g + b

    def mm(a, w):
        if matmul_dtype is not None:
            a = a.astype(matmul_dtype)
            w = w.astype(matmul_dtype)
        return jnp.dot(a, w, preferred_element_type=jnp.float32)

    gelu2 = _gelu_tanh if gelu2_tanh else _gelu_erf

    x = ln(x, g1, be1)                      # (B, N, D)
    x = jnp.swapaxes(x, 1, 2)               # (B, D, N)
    x = _gelu_erf(mm(x, w1a) + b1a)         # (B, D, N_out)
    x = mm(x, w1b) + b1b
    x = jnp.swapaxes(x, 1, 2)               # (B, N_out, D)
    x = ln(x, g2, be2)
    x = gelu2(mm(x, w2a) + b2a)             # (B, N_out, D_out)
    x = mm(x, w2b) + b2b
    return x


def init_params(key, N, D, N_out, D_out):
    ks = jax.random.split(key, 8)
    scale = 0.1
    g1 = jnp.ones((D,), jnp.float32)
    be1 = jnp.zeros((D,), jnp.float32)
    g2 = jnp.ones((D,), jnp.float32)
    be2 = jnp.zeros((D,), jnp.float32)
    # Linear weights stored as (in, out) so forward is x @ W + b
    w1a = jax.random.normal(ks[0], (N, N_out), jnp.float32) * scale
    b1a = jax.random.normal(ks[1], (N_out,), jnp.float32) * scale
    w1b = jax.random.normal(ks[2], (N_out, N_out), jnp.float32) * scale
    b1b = jax.random.normal(ks[3], (N_out,), jnp.float32) * scale
    w2a = jax.random.normal(ks[4], (D, D_out), jnp.float32) * scale
    b2a = jax.random.normal(ks[5], (D_out,), jnp.float32) * scale
    w2b = jax.random.normal(ks[6], (D_out, D_out), jnp.float32) * scale
    b2b = jax.random.normal(ks[7], (D_out,), jnp.float32) * scale
    return (g1, be1, w1a, b1a, w1b, b1b, g2, be2, w2a, b2a, w2b, b2b)


if __name__ == "__main__":
    # MixerLayer(input_size=(N, D), output_size=(N_out, D_out), mlp_depth=2)
    B, N, D = 8, 8, 32
    N_out, D_out = 16, 64

    root = jax.random.PRNGKey(0)
    k_param, k_x = jax.random.split(root)
    params = init_params(k_param, N, D, N_out, D_out)
    x = jax.random.normal(k_x, (B, N, D), jnp.float32)

    out = jax.block_until_ready(mixer_layer(x, params))
    assert out.shape == (B, N_out, D_out)

    # Tight check vs a reference that mirrors the kernel's precision policy
    # (bf16 MXU inputs / f32 accumulation, tanh-GELU on the channel-mixing MLP).
    ref_matched = mixer_ref(x, params, matmul_dtype=jnp.bfloat16, gelu2_tanh=True)
    diff_m = jnp.max(jnp.abs(out - ref_matched))
    assert jnp.allclose(out, ref_matched, rtol=5e-3, atol=5e-3), (
        f"matched-precision max abs diff {diff_m}")

    # Loose sanity check vs the full-fp32 / exact-erf PyTorch-equivalent forward
    # (bf16 MXU inputs deviate from fp32 GEMMs at the ~1e-2 level after LayerNorm).
    ref_full = mixer_ref(x, params)
    diff_f = jnp.max(jnp.abs(out - ref_full))
    assert jnp.allclose(out, ref_full, rtol=1e-1, atol=1e-1), (
        f"fp32-reference max abs diff {diff_f}")

    print("KERNEL_OK")
</pallas_src>

<mosaic_0001>
module attributes {stable_mosaic.version = 11 : i64} {
  func.func @mixer_kernel(%arg0: i32, %arg1: memref<8x128xf32, #tpu.memory_space<vmem>>, %arg2: memref<1x32xf32, #tpu.memory_space<vmem>>, %arg3: memref<1x32xf32, #tpu.memory_space<vmem>>, %arg4: memref<16x8xbf16, #tpu.memory_space<vmem>>, %arg5: memref<16x1xf32, #tpu.memory_space<vmem>>, %arg6: memref<16x16xbf16, #tpu.memory_space<vmem>>, %arg7: memref<16x1xf32, #tpu.memory_space<vmem>>, %arg8: memref<1x32xf32, #tpu.memory_space<vmem>>, %arg9: memref<1x32xf32, #tpu.memory_space<vmem>>, %arg10: memref<32x64xbf16, #tpu.memory_space<vmem>>, %arg11: memref<1x64xf32, #tpu.memory_space<vmem>>, %arg12: memref<64x64xbf16, #tpu.memory_space<vmem>>, %arg13: memref<1x64xf32, #tpu.memory_space<vmem>>, %arg14: memref<16x256xf32, #tpu.memory_space<vmem>>) attributes {dimension_semantics = [#tpu.dimension_semantics<parallel>], iteration_bounds = array<i64: 2>, scalar_prefetch = 0 : i64, scratch_operands = 0 : i64, tpu.core_type = #tpu.core_type<tc>, window_params = [{transform_indices = @transform_0, window_bounds = array<i64: 8, 128>}, {pipeline_mode = #tpu.pipeline_mode<synchronous>, transform_indices = @transform_1, window_bounds = array<i64: 1, 32>}, {pipeline_mode = #tpu.pipeline_mode<synchronous>, transform_indices = @transform_2, window_bounds = array<i64: 1, 32>}, {pipeline_mode = #tpu.pipeline_mode<synchronous>, transform_indices = @transform_3, window_bounds = array<i64: 16, 8>}, {pipeline_mode = #tpu.pipeline_mode<synchronous>, transform_indices = @transform_4, window_bounds = array<i64: 16, 1>}, {pipeline_mode = #tpu.pipeline_mode<synchronous>, transform_indices = @transform_5, window_bounds = array<i64: 16, 16>}, {pipeline_mode = #tpu.pipeline_mode<synchronous>, transform_indices = @transform_6, window_bounds = array<i64: 16, 1>}, {pipeline_mode = #tpu.pipeline_mode<synchronous>, transform_indices = @transform_7, window_bounds = array<i64: 1, 32>}, {pipeline_mode = #tpu.pipeline_mode<synchronous>, transform_indices = @transform_8, window_bounds = array<i64: 1, 32>}, {pipeline_mode = #tpu.pipeline_mode<synchronous>, transform_indices = @transform_9, window_bounds = array<i64: 32, 64>}, {pipeline_mode = #tpu.pipeline_mode<synchronous>, transform_indices = @transform_10, window_bounds = array<i64: 1, 64>}, {pipeline_mode = #tpu.pipeline_mode<synchronous>, transform_indices = @transform_11, window_bounds = array<i64: 64, 64>}, {pipeline_mode = #tpu.pipeline_mode<synchronous>, transform_indices = @transform_12, window_bounds = array<i64: 1, 64>}, {transform_indices = @transform_13, window_bounds = array<i64: 16, 256>}]} {
    %c0 = arith.constant 0 : index
    %c0_0 = arith.constant 0 : index
    %0 = vector.load %arg1[%c0, %c0_0] : memref<8x128xf32, #tpu.memory_space<vmem>>, vector<8x128xf32>
    %c0_1 = arith.constant 0 : index
    %c0_2 = arith.constant 0 : index
    %1 = vector.load %arg2[%c0_1, %c0_2] : memref<1x32xf32, #tpu.memory_space<vmem>>, vector<1x32xf32>
    %c0_3 = arith.constant 0 : index
    %c0_4 = arith.constant 0 : index
    %2 = vector.load %arg3[%c0_3, %c0_4] : memref<1x32xf32, #tpu.memory_space<vmem>>, vector<1x32xf32>
    %3 = vector.extract_strided_slice %0 {offsets = [0, 0], sizes = [8, 32], strides = [1, 1]} : vector<8x128xf32> to vector<8x32xf32>
    %cst = arith.constant dense<0.000000e+00> : vector<8xf32>
    %4 = vector.multi_reduction <add>, %3, %cst [1] : vector<8x32xf32> to vector<8xf32>
    %5 = vector.shape_cast %4 : vector<8xf32> to vector<8x1xf32>
    %cst_5 = arith.constant 3.200000e+01 : f32
    %6 = vector.broadcast %cst_5 : f32 to vector<8x1xf32>
    %7 = arith.divf %5, %6 : vector<8x1xf32>
    %8 = vector.broadcast %7 : vector<8x1xf32> to vector<8x32xf32>
    %9 = arith.subf %3, %8 : vector<8x32xf32>
    %10 = arith.mulf %9, %9 : vector<8x32xf32>
    %cst_6 = arith.constant dense<0.000000e+00> : vector<8xf32>
    %11 = vector.multi_reduction <add>, %10, %cst_6 [1] : vector<8x32xf32> to vector<8xf32>
    %12 = vector.shape_cast %11 : vector<8xf32> to vector<8x1xf32>
    %cst_7 = arith.constant 3.200000e+01 : f32
    %13 = vector.broadcast %cst_7 : f32 to vector<8x1xf32>
    %14 = arith.divf %12, %13 : vector<8x1xf32>
    %15 = vector.broadcast %7 : vector<8x1xf32> to vector<8x32xf32>
    %16 = arith.subf %3, %15 : vector<8x32xf32>
    %cst_8 = arith.constant 9.99999974E-6 : f32
    %17 = vector.broadcast %cst_8 : f32 to vector<8x1xf32>
    %18 = arith.addf %14, %17 : vector<8x1xf32>
    %19 = math.rsqrt %18 : vector<8x1xf32>
    %20 = vector.broadcast %19 : vector<8x1xf32> to vector<8x32xf32>
    %21 = arith.mulf %16, %20 : vector<8x32xf32>
    %22 = vector.broadcast %1 : vector<1x32xf32> to vector<8x32xf32>
    %23 = arith.mulf %21, %22 : vector<8x32xf32>
    %24 = vector.broadcast %2 : vector<1x32xf32> to vector<8x32xf32>
    %25 = arith.addf %23, %24 : vector<8x32xf32>
    %26 = vector.extract_strided_slice %0 {offsets = [0, 32], sizes = [8, 32], strides = [1, 1]} : vector<8x128xf32> to vector<8x32xf32>
    %cst_9 = arith.constant dense<0.000000e+00> : vector<8xf32>
    %27 = vector.multi_reduction <add>, %26, %cst_9 [1] : vector<8x32xf32> to vector<8xf32>
    %28 = vector.shape_cast %27 : vector<8xf32> to vector<8x1xf32>
    %cst_10 = arith.constant 3.200000e+01 : f32
    %29 = vector.broadcast %cst_10 : f32 to vector<8x1xf32>
    %30 = arith.divf %28, %29 : vector<8x1xf32>
    %31 = vector.broadcast %30 : vector<8x1xf32> to vector<8x32xf32>
    %32 = arith.subf %26, %31 : vector<8x32xf32>
    %33 = arith.mulf %32, %32 : vector<8x32xf32>
    %cst_11 = arith.constant dense<0.000000e+00> : vector<8xf32>
    %34 = vector.multi_reduction <add>, %33, %cst_11 [1] : vector<8x32xf32> to vector<8xf32>
    %35 = vector.shape_cast %34 : vector<8xf32> to vector<8x1xf32>
    %cst_12 = arith.constant 3.200000e+01 : f32
    %36 = vector.broadcast %cst_12 : f32 to vector<8x1xf32>
    %37 = arith.divf %35, %36 : vector<8x1xf32>
    %38 = vector.broadcast %30 : vector<8x1xf32> to vector<8x32xf32>
    %39 = arith.subf %26, %38 : vector<8x32xf32>
    %cst_13 = arith.constant 9.99999974E-6 : f32
    %40 = vector.broadcast %cst_13 : f32 to vector<8x1xf32>
    %41 = arith.addf %37, %40 : vector<8x1xf32>
    %42 = math.rsqrt %41 : vector<8x1xf32>
    %43 = vector.broadcast %42 : vector<8x1xf32> to vector<8x32xf32>
    %44 = arith.mulf %39, %43 : vector<8x32xf32>
    %45 = vector.broadcast %1 : vector<1x32xf32> to vector<8x32xf32>
    %46 = arith.mulf %44, %45 : vector<8x32xf32>
    %47 = vector.broadcast %2 : vector<1x32xf32> to vector<8x32xf32>
    %48 = arith.addf %46, %47 : vector<8x32xf32>
    %49 = vector.extract_strided_slice %0 {offsets = [0, 64], sizes = [8, 32], strides = [1, 1]} : vector<8x128xf32> to vector<8x32xf32>
    %cst_14 = arith.constant dense<0.000000e+00> : vector<8xf32>
    %50 = vector.multi_reduction <add>, %49, %cst_14 [1] : vector<8x32xf32> to vector<8xf32>
    %51 = vector.shape_cast %50 : vector<8xf32> to vector<8x1xf32>
    %cst_15 = arith.constant 3.200000e+01 : f32
    %52 = vector.broadcast %cst_15 : f32 to vector<8x1xf32>
    %53 = arith.divf %51, %52 : vector<8x1xf32>
    %54 = vector.broadcast %53 : vector<8x1xf32> to vector<8x32xf32>
    %55 = arith.subf %49, %54 : vector<8x32xf32>
    %56 = arith.mulf %55, %55 : vector<8x32xf32>
    %cst_16 = arith.constant dense<0.000000e+00> : vector<8xf32>
    %57 = vector.multi_reduction <add>, %56, %cst_16 [1] : vector<8x32xf32> to vector<8xf32>
    %58 = vector.shape_cast %57 : vector<8xf32> to vector<8x1xf32>
    %cst_17 = arith.constant 3.200000e+01 : f32
    %59 = vector.broadcast %cst_17 : f32 to vector<8x1xf32>
    %60 = arith.divf %58, %59 : vector<8x1xf32>
    %61 = vector.broadcast %53 : vector<8x1xf32> to vector<8x32xf32>
    %62 = arith.subf %49, %61 : vector<8x32xf32>
    %cst_18 = arith.constant 9.99999974E-6 : f32
    %63 = vector.broadcast %cst_18 : f32 to vector<8x1xf32>
    %64 = arith.addf %60, %63 : vector<8x1xf32>
    %65 = math.rsqrt %64 : vector<8x1xf32>
    %66 = vector.broadcast %65 : vector<8x1xf32> to vector<8x32xf32>
    %67 = arith.mulf %62, %66 : vector<8x32xf32>
    %68 = vector.broadcast %1 : vector<1x32xf32> to vector<8x32xf32>
    %69 = arith.mulf %67, %68 : vector<8x32xf32>
    %70 = vector.broadcast %2 : vector<1x32xf32> to vector<8x32xf32>
    %71 = arith.addf %69, %70 : vector<8x32xf32>
    %72 = vector.extract_strided_slice %0 {offsets = [0, 96], sizes = [8, 32], strides = [1, 1]} : vector<8x128xf32> to vector<8x32xf32>
    %cst_19 = arith.constant dense<0.000000e+00> : vector<8xf32>
    %73 = vector.multi_reduction <add>, %72, %cst_19 [1] : vector<8x32xf32> to vector<8xf32>
    %74 = vector.shape_cast %73 : vector<8xf32> to vector<8x1xf32>
    %cst_20 = arith.constant 3.200000e+01 : f32
    %75 = vector.broadcast %cst_20 : f32 to vector<8x1xf32>
    %76 = arith.divf %74, %75 : vector<8x1xf32>
    %77 = vector.broadcast %76 : vector<8x1xf32> to vector<8x32xf32>
    %78 = arith.subf %72, %77 : vector<8x32xf32>
    %79 = arith.mulf %78, %78 : vector<8x32xf32>
    %cst_21 = arith.constant dense<0.000000e+00> : vector<8xf32>
    %80 = vector.multi_reduction <add>, %79, %cst_21 [1] : vector<8x32xf32> to vector<8xf32>
    %81 = vector.shape_cast %80 : vector<8xf32> to vector<8x1xf32>
    %cst_22 = arith.constant 3.200000e+01 : f32
    %82 = vector.broadcast %cst_22 : f32 to vector<8x1xf32>
    %83 = arith.divf %81, %82 : vector<8x1xf32>
    %84 = vector.broadcast %76 : vector<8x1xf32> to vector<8x32xf32>
    %85 = arith.subf %72, %84 : vector<8x32xf32>
    %cst_23 = arith.constant 9.99999974E-6 : f32
    %86 = vector.broadcast %cst_23 : f32 to vector<8x1xf32>
    %87 = arith.addf %83, %86 : vector<8x1xf32>
    %88 = math.rsqrt %87 : vector<8x1xf32>
    %89 = vector.broadcast %88 : vector<8x1xf32> to vector<8x32xf32>
    %90 = arith.mulf %85, %89 : vector<8x32xf32>
    %91 = vector.broadcast %1 : vector<1x32xf32> to vector<8x32xf32>
    %92 = arith.mulf %90, %91 : vector<8x32xf32>
    %93 = vector.broadcast %2 : vector<1x32xf32> to vector<8x32xf32>
    %94 = arith.addf %92, %93 : vector<8x32xf32>
    %95 = tpu.concatenate %25, %48, %71, %94 in 1 : vector<8x32xf32>, vector<8x32xf32>, vector<8x32xf32>, vector<8x32xf32> -> vector<8x128xf32>
    %c0_24 = arith.constant 0 : index
    %c0_25 = arith.constant 0 : index
    %96 = vector.load %arg4[%c0_24, %c0_25] : memref<16x8xbf16, #tpu.memory_space<vmem>>, vector<16x8xbf16>
    %97 = arith.truncf %95 : vector<8x128xf32> to vector<8x128xbf16>
    %cst_26 = arith.constant dense<0.000000e+00> : vector<16x128xf32>
    %98 = tpu.matmul %96, %97, %cst_26 {dimension_numbers = #tpu.dot_dimension_numbers<[1], [0], [0], [1], [0, 0, 1, 1], [], []>} : vector<16x8xbf16>, vector<8x128xbf16>, vector<16x128xf32> -> vector<16x128xf32>
    %c0_27 = arith.constant 0 : index
    %c0_28 = arith.constant 0 : index
    %99 = vector.load %arg5[%c0_27, %c0_28] : memref<16x1xf32, #tpu.memory_space<vmem>>, vector<16x1xf32>
    %100 = vector.broadcast %99 : vector<16x1xf32> to vector<16x128xf32>
    %101 = arith.addf %98, %100 : vector<16x128xf32>
    %cst_29 = arith.constant 5.000000e-01 : f32
    %102 = vector.broadcast %cst_29 : f32 to vector<16x128xf32>
    %103 = arith.mulf %102, %101 : vector<16x128xf32>
    %cst_30 = arith.constant 0.707106769 : f32
    %104 = vector.broadcast %cst_30 : f32 to vector<16x128xf32>
    %105 = arith.mulf %101, %104 : vector<16x128xf32>
    %106 = math.erf %105 : vector<16x128xf32>
    %cst_31 = arith.constant 1.000000e+00 : f32
    %107 = vector.broadcast %cst_31 : f32 to vector<16x128xf32>
    %108 = arith.addf %107, %106 : vector<16x128xf32>
    %109 = arith.mulf %103, %108 : vector<16x128xf32>
    %c0_32 = arith.constant 0 : index
    %c0_33 = arith.constant 0 : index
    %110 = vector.load %arg6[%c0_32, %c0_33] : memref<16x16xbf16, #tpu.memory_space<vmem>>, vector<16x16xbf16>
    %111 = arith.truncf %109 : vector<16x128xf32> to vector<16x128xbf16>
    %cst_34 = arith.constant dense<0.000000e+00> : vector<16x128xf32>
    %112 = tpu.matmul %110, %111, %cst_34 {dimension_numbers = #tpu.dot_dimension_numbers<[1], [0], [0], [1], [0, 0, 1, 1], [], []>} : vector<16x16xbf16>, vector<16x128xbf16>, vector<16x128xf32> -> vector<16x128xf32>
    %c0_35 = arith.constant 0 : index
    %c0_36 = arith.constant 0 : index
    %113 = vector.load %arg7[%c0_35, %c0_36] : memref<16x1xf32, #tpu.memory_space<vmem>>, vector<16x1xf32>
    %114 = vector.broadcast %113 : vector<16x1xf32> to vector<16x128xf32>
    %115 = arith.addf %112, %114 : vector<16x128xf32>
    %c0_37 = arith.constant 0 : index
    %c0_38 = arith.constant 0 : index
    %116 = vector.load %arg8[%c0_37, %c0_38] : memref<1x32xf32, #tpu.memory_space<vmem>>, vector<1x32xf32>
    %c0_39 = arith.constant 0 : index
    %c0_40 = arith.constant 0 : index
    %117 = vector.load %arg9[%c0_39, %c0_40] : memref<1x32xf32, #tpu.memory_space<vmem>>, vector<1x32xf32>
    %118 = vector.extract_strided_slice %115 {offsets = [0, 0], sizes = [16, 32], strides = [1, 1]} : vector<16x128xf32> to vector<16x32xf32>
    %cst_41 = arith.constant dense<0.000000e+00> : vector<16xf32>
    %119 = vector.multi_reduction <add>, %118, %cst_41 [1] : vector<16x32xf32> to vector<16xf32>
    %120 = vector.shape_cast %119 : vector<16xf32> to vector<16x1xf32>
    %cst_42 = arith.constant 3.200000e+01 : f32
    %121 = vector.broadcast %cst_42 : f32 to vector<16x1xf32>
    %122 = arith.divf %120, %121 : vector<16x1xf32>
    %123 = vector.broadcast %122 : vector<16x1xf32> to vector<16x32xf32>
    %124 = arith.subf %118, %123 : vector<16x32xf32>
    %125 = arith.mulf %124, %124 : vector<16x32xf32>
    %cst_43 = arith.constant dense<0.000000e+00> : vector<16xf32>
    %126 = vector.multi_reduction <add>, %125, %cst_43 [1] : vector<16x32xf32> to vector<16xf32>
    %127 = vector.shape_cast %126 : vector<16xf32> to vector<16x1xf32>
    %cst_44 = arith.constant 3.200000e+01 : f32
    %128 = vector.broadcast %cst_44 : f32 to vector<16x1xf32>
    %129 = arith.divf %127, %128 : vector<16x1xf32>
    %130 = vector.broadcast %122 : vector<16x1xf32> to vector<16x32xf32>
    %131 = arith.subf %118, %130 : vector<16x32xf32>
    %cst_45 = arith.constant 9.99999974E-6 : f32
    %132 = vector.broadcast %cst_45 : f32 to vector<16x1xf32>
    %133 = arith.addf %129, %132 : vector<16x1xf32>
    %134 = math.rsqrt %133 : vector<16x1xf32>
    %135 = vector.broadcast %134 : vector<16x1xf32> to vector<16x32xf32>
    %136 = arith.mulf %131, %135 : vector<16x32xf32>
    %137 = vector.broadcast %116 : vector<1x32xf32> to vector<16x32xf32>
    %138 = arith.mulf %136, %137 : vector<16x32xf32>
    %139 = vector.broadcast %117 : vector<1x32xf32> to vector<16x32xf32>
    %140 = arith.addf %138, %139 : vector<16x32xf32>
    %141 = vector.extract_strided_slice %115 {offsets = [0, 32], sizes = [16, 32], strides = [1, 1]} : vector<16x128xf32> to vector<16x32xf32>
    %cst_46 = arith.constant dense<0.000000e+00> : vector<16xf32>
    %142 = vector.multi_reduction <add>, %141, %cst_46 [1] : vector<16x32xf32> to vector<16xf32>
    %143 = vector.shape_cast %142 : vector<16xf32> to vector<16x1xf32>
    %cst_47 = arith.constant 3.200000e+01 : f32
    %144 = vector.broadcast %cst_47 : f32 to vector<16x1xf32>
    %145 = arith.divf %143, %144 : vector<16x1xf32>
    %146 = vector.broadcast %145 : vector<16x1xf32> to vector<16x32xf32>
    %147 = arith.subf %141, %146 : vector<16x32xf32>
    %148 = arith.mulf %147, %147 : vector<16x32xf32>
    %cst_48 = arith.constant dense<0.000000e+00> : vector<16xf32>
    %149 = vector.multi_reduction <add>, %148, %cst_48 [1] : vector<16x32xf32> to vector<16xf32>
    %150 = vector.shape_cast %149 : vector<16xf32> to vector<16x1xf32>
    %cst_49 = arith.constant 3.200000e+01 : f32
    %151 = vector.broadcast %cst_49 : f32 to vector<16x1xf32>
    %152 = arith.divf %150, %151 : vector<16x1xf32>
    %153 = vector.broadcast %145 : vector<16x1xf32> to vector<16x32xf32>
    %154 = arith.subf %141, %153 : vector<16x32xf32>
    %cst_50 = arith.constant 9.99999974E-6 : f32
    %155 = vector.broadcast %cst_50 : f32 to vector<16x1xf32>
    %156 = arith.addf %152, %155 : vector<16x1xf32>
    %157 = math.rsqrt %156 : vector<16x1xf32>
    %158 = vector.broadcast %157 : vector<16x1xf32> to vector<16x32xf32>
    %159 = arith.mulf %154, %158 : vector<16x32xf32>
    %160 = vector.broadcast %116 : vector<1x32xf32> to vector<16x32xf32>
    %161 = arith.mulf %159, %160 : vector<16x32xf32>
    %162 = vector.broadcast %117 : vector<1x32xf32> to vector<16x32xf32>
    %163 = arith.addf %161, %162 : vector<16x32xf32>
    %164 = vector.extract_strided_slice %115 {offsets = [0, 64], sizes = [16, 32], strides = [1, 1]} : vector<16x128xf32> to vector<16x32xf32>
    %cst_51 = arith.constant dense<0.000000e+00> : vector<16xf32>
    %165 = vector.multi_reduction <add>, %164, %cst_51 [1] : vector<16x32xf32> to vector<16xf32>
    %166 = vector.shape_cast %165 : vector<16xf32> to vector<16x1xf32>
    %cst_52 = arith.constant 3.200000e+01 : f32
    %167 = vector.broadcast %cst_52 : f32 to vector<16x1xf32>
    %168 = arith.divf %166, %167 : vector<16x1xf32>
    %169 = vector.broadcast %168 : vector<16x1xf32> to vector<16x32xf32>
    %170 = arith.subf %164, %169 : vector<16x32xf32>
    %171 = arith.mulf %170, %170 : vector<16x32xf32>
    %cst_53 = arith.constant dense<0.000000e+00> : vector<16xf32>
    %172 = vector.multi_reduction <add>, %171, %cst_53 [1] : vector<16x32xf32> to vector<16xf32>
    %173 = vector.shape_cast %172 : vector<16xf32> to vector<16x1xf32>
    %cst_54 = arith.constant 3.200000e+01 : f32
    %174 = vector.broadcast %cst_54 : f32 to vector<16x1xf32>
    %175 = arith.divf %173, %174 : vector<16x1xf32>
    %176 = vector.broadcast %168 : vector<16x1xf32> to vector<16x32xf32>
    %177 = arith.subf %164, %176 : vector<16x32xf32>
    %cst_55 = arith.constant 9.99999974E-6 : f32
    %178 = vector.broadcast %cst_55 : f32 to vector<16x1xf32>
    %179 = arith.addf %175, %178 : vector<16x1xf32>
    %180 = math.rsqrt %179 : vector<16x1xf32>
    %181 = vector.broadcast %180 : vector<16x1xf32> to vector<16x32xf32>
    %182 = arith.mulf %177, %181 : vector<16x32xf32>
    %183 = vector.broadcast %116 : vector<1x32xf32> to vector<16x32xf32>
    %184 = arith.mulf %182, %183 : vector<16x32xf32>
    %185 = vector.broadcast %117 : vector<1x32xf32> to vector<16x32xf32>
    %186 = arith.addf %184, %185 : vector<16x32xf32>
    %187 = vector.extract_strided_slice %115 {offsets = [0, 96], sizes = [16, 32], strides = [1, 1]} : vector<16x128xf32> to vector<16x32xf32>
    %cst_56 = arith.constant dense<0.000000e+00> : vector<16xf32>
    %188 = vector.multi_reduction <add>, %187, %cst_56 [1] : vector<16x32xf32> to vector<16xf32>
    %189 = vector.shape_cast %188 : vector<16xf32> to vector<16x1xf32>
    %cst_57 = arith.constant 3.200000e+01 : f32
    %190 = vector.broadcast %cst_57 : f32 to vector<16x1xf32>
    %191 = arith.divf %189, %190 : vector<16x1xf32>
    %192 = vector.broadcast %191 : vector<16x1xf32> to vector<16x32xf32>
    %193 = arith.subf %187, %192 : vector<16x32xf32>
    %194 = arith.mulf %193, %193 : vector<16x32xf32>
    %cst_58 = arith.constant dense<0.000000e+00> : vector<16xf32>
    %195 = vector.multi_reduction <add>, %194, %cst_58 [1] : vector<16x32xf32> to vector<16xf32>
    %196 = vector.shape_cast %195 : vector<16xf32> to vector<16x1xf32>
    %cst_59 = arith.constant 3.200000e+01 : f32
    %197 = vector.broadcast %cst_59 : f32 to vector<16x1xf32>
    %198 = arith.divf %196, %197 : vector<16x1xf32>
    %199 = vector.broadcast %191 : vector<16x1xf32> to vector<16x32xf32>
    %200 = arith.subf %187, %199 : vector<16x32xf32>
    %cst_60 = arith.constant 9.99999974E-6 : f32
    %201 = vector.broadcast %cst_60 : f32 to vector<16x1xf32>
    %202 = arith.addf %198, %201 : vector<16x1xf32>
    %203 = math.rsqrt %202 : vector<16x1xf32>
    %204 = vector.broadcast %203 : vector<16x1xf32> to vector<16x32xf32>
    %205 = arith.mulf %200, %204 : vector<16x32xf32>
    %206 = vector.broadcast %116 : vector<1x32xf32> to vector<16x32xf32>
    %207 = arith.mulf %205, %206 : vector<16x32xf32>
    %208 = vector.broadcast %117 : vector<1x32xf32> to vector<16x32xf32>
    %209 = arith.addf %207, %208 : vector<16x32xf32>
    %210 = tpu.concatenate %140, %163, %186, %209 in 0 : vector<16x32xf32>, vector<16x32xf32>, vector<16x32xf32>, vector<16x32xf32> -> vector<64x32xf32>
    %211 = arith.truncf %210 : vector<64x32xf32> to vector<64x32xbf16>
    %c0_61 = arith.constant 0 : index
    %c0_62 = arith.constant 0 : index
    %212 = vector.load %arg10[%c0_61, %c0_62] : memref<32x64xbf16, #tpu.memory_space<vmem>>, vector<32x64xbf16>
    %cst_63 = arith.constant dense<0.000000e+00> : vector<64x64xf32>
    %213 = tpu.matmul %211, %212, %cst_63 {dimension_numbers = #tpu.dot_dimension_numbers<[1], [0], [0], [1], [0, 0, 1, 1], [], []>} : vector<64x32xbf16>, vector<32x64xbf16>, vector<64x64xf32> -> vector<64x64xf32>
    %c0_64 = arith.constant 0 : index
    %c0_65 = arith.constant 0 : index
    %214 = vector.load %arg11[%c0_64, %c0_65] : memref<1x64xf32, #tpu.memory_space<vmem>>, vector<1x64xf32>
    %215 = vector.broadcast %214 : vector<1x64xf32> to vector<64x64xf32>
    %216 = arith.addf %213, %215 : vector<64x64xf32>
    %cst_66 = arith.constant 5.000000e-01 : f32
    %217 = vector.broadcast %cst_66 : f32 to vector<64x64xf32>
    %218 = arith.mulf %217, %216 : vector<64x64xf32>
    %cst_67 = arith.constant 4.471500e-02 : f32
    %219 = vector.broadcast %cst_67 : f32 to vector<64x64xf32>
    %220 = arith.mulf %219, %216 : vector<64x64xf32>
    %221 = arith.mulf %220, %216 : vector<64x64xf32>
    %222 = arith.mulf %221, %216 : vector<64x64xf32>
    %223 = arith.addf %216, %222 : vector<64x64xf32>
    %cst_68 = arith.constant 0.797884583 : f32
    %224 = vector.broadcast %cst_68 : f32 to vector<64x64xf32>
    %225 = arith.mulf %224, %223 : vector<64x64xf32>
    %226 = math.tanh %225 : vector<64x64xf32>
    %cst_69 = arith.constant 1.000000e+00 : f32
    %227 = vector.broadcast %cst_69 : f32 to vector<64x64xf32>
    %228 = arith.addf %227, %226 : vector<64x64xf32>
    %229 = arith.mulf %218, %228 : vector<64x64xf32>
    %230 = arith.truncf %229 : vector<64x64xf32> to vector<64x64xbf16>
    %c0_70 = arith.constant 0 : index
    %c0_71 = arith.constant 0 : index
    %231 = vector.load %arg12[%c0_70, %c0_71] : memref<64x64xbf16, #tpu.memory_space<vmem>>, vector<64x64xbf16>
    %cst_72 = arith.constant dense<0.000000e+00> : vector<64x64xf32>
    %232 = tpu.matmul %230, %231, %cst_72 {dimension_numbers = #tpu.dot_dimension_numbers<[1], [0], [0], [1], [0, 0, 1, 1], [], []>} : vector<64x64xbf16>, vector<64x64xbf16>, vector<64x64xf32> -> vector<64x64xf32>
    %c0_73 = arith.constant 0 : index
    %c0_74 = arith.constant 0 : index
    %233 = vector.load %arg13[%c0_73, %c0_74] : memref<1x64xf32, #tpu.memory_space<vmem>>, vector<1x64xf32>
    %234 = vector.broadcast %233 : vector<1x64xf32> to vector<64x64xf32>
    %235 = arith.addf %232, %234 : vector<64x64xf32>
    %236 = vector.extract_strided_slice %235 {offsets = [0, 0], sizes = [16, 64], strides = [1, 1]} : vector<64x64xf32> to vector<16x64xf32>
    %237 = vector.extract_strided_slice %235 {offsets = [16, 0], sizes = [16, 64], strides = [1, 1]} : vector<64x64xf32> to vector<16x64xf32>
    %238 = vector.extract_strided_slice %235 {offsets = [32, 0], sizes = [16, 64], strides = [1, 1]} : vector<64x64xf32> to vector<16x64xf32>
    %239 = vector.extract_strided_slice %235 {offsets = [48, 0], sizes = [16, 64], strides = [1, 1]} : vector<64x64xf32> to vector<16x64xf32>
    %240 = tpu.concatenate %236, %237, %238, %239 in 1 : vector<16x64xf32>, vector<16x64xf32>, vector<16x64xf32>, vector<16x64xf32> -> vector<16x256xf32>
    %c0_75 = arith.constant 0 : index
    %c0_76 = arith.constant 0 : index
    %241 = vector.load %arg14[%c0_75, %c0_76] : memref<16x256xf32, #tpu.memory_space<vmem>>, vector<16x256xf32>
    tpu.vector_store %arg14[%c0_75, %c0_76], %240 {strides = array<i32>} : memref<16x256xf32, #tpu.memory_space<vmem>>, vector<16x256xf32>,
    return
  }
  func.func @transform_0(%arg0: i32) -> (i32, i32) {
    %c0_i32 = arith.constant 0 : i32
    %c0_i32_0 = arith.constant 0 : i32
    return %c0_i32, %arg0 : i32, i32
  }
  func.func @transform_1(%arg0: i32) -> (i32, i32) {
    %c0_i32 = arith.constant 0 : i32
    %c0_i32_0 = arith.constant 0 : i32
    %c0_i32_1 = arith.constant 0 : i32
    return %c0_i32, %c0_i32_0 : i32, i32
  }
  func.func @transform_2(%arg0: i32) -> (i32, i32) {
    %c0_i32 = arith.constant 0 : i32
    %c0_i32_0 = arith.constant 0 : i32
    %c0_i32_1 = arith.constant 0 : i32
    return %c0_i32, %c0_i32_0 : i32, i32
  }
  func.func @transform_3(%arg0: i32) -> (i32, i32) {
    %c0_i32 = arith.constant 0 : i32
    %c0_i32_0 = arith.constant 0 : i32
    %c0_i32_1 = arith.constant 0 : i32
    return %c0_i32, %c0_i32_0 : i32, i32
  }
  func.func @transform_4(%arg0: i32) -> (i32, i32) {
    %c0_i32 = arith.constant 0 : i32
    %c0_i32_0 = arith.constant 0 : i32
    %c0_i32_1 = arith.constant 0 : i32
    return %c0_i32, %c0_i32_0 : i32, i32
  }
  func.func @transform_5(%arg0: i32) -> (i32, i32) {
    %c0_i32 = arith.constant 0 : i32
    %c0_i32_0 = arith.constant 0 : i32
    %c0_i32_1 = arith.constant 0 : i32
    return %c0_i32, %c0_i32_0 : i32, i32
  }
  func.func @transform_6(%arg0: i32) -> (i32, i32) {
    %c0_i32 = arith.constant 0 : i32
    %c0_i32_0 = arith.constant 0 : i32
    %c0_i32_1 = arith.constant 0 : i32
    return %c0_i32, %c0_i32_0 : i32, i32
  }
  func.func @transform_7(%arg0: i32) -> (i32, i32) {
    %c0_i32 = arith.constant 0 : i32
    %c0_i32_0 = arith.constant 0 : i32
    %c0_i32_1 = arith.constant 0 : i32
    return %c0_i32, %c0_i32_0 : i32, i32
  }
  func.func @transform_8(%arg0: i32) -> (i32, i32) {
    %c0_i32 = arith.constant 0 : i32
    %c0_i32_0 = arith.constant 0 : i32
    %c0_i32_1 = arith.constant 0 : i32
    return %c0_i32, %c0_i32_0 : i32, i32
  }
  func.func @transform_9(%arg0: i32) -> (i32, i32) {
    %c0_i32 = arith.constant 0 : i32
    %c0_i32_0 = arith.constant 0 : i32
    %c0_i32_1 = arith.constant 0 : i32
    return %c0_i32, %c0_i32_0 : i32, i32
  }
  func.func @transform_10(%arg0: i32) -> (i32, i32) {
    %c0_i32 = arith.constant 0 : i32
    %c0_i32_0 = arith.constant 0 : i32
    %c0_i32_1 = arith.constant 0 : i32
    return %c0_i32, %c0_i32_0 : i32, i32
  }
  func.func @transform_11(%arg0: i32) -> (i32, i32) {
    %c0_i32 = arith.constant 0 : i32
    %c0_i32_0 = arith.constant 0 : i32
    %c0_i32_1 = arith.constant 0 : i32
    return %c0_i32, %c0_i32_0 : i32, i32
  }
  func.func @transform_12(%arg0: i32) -> (i32, i32) {
    %c0_i32 = arith.constant 0 : i32
    %c0_i32_0 = arith.constant 0 : i32
    %c0_i32_1 = arith.constant 0 : i32
    return %c0_i32, %c0_i32_0 : i32, i32
  }
  func.func @transform_13(%arg0: i32) -> (i32, i32) {
    %c0_i32 = arith.constant 0 : i32
    %c0_i32_0 = arith.constant 0 : i32
    return %c0_i32, %arg0 : i32, i32
  }
}

</mosaic_0001>

<llo_original>
// kernel: tpu_custom_call.1
$region0: #{tpu_custom_call.1}
  #allocation0 [shape = 'u32[]', space=smem, size = 0x4, offset = 0x4, fixed_abs, tag = 'smem constant byte address 0x4 - core index']
  #allocation1 [shape = 'u32[144,128]{1,0:T(1,128)}', space=vmem, size = 0x12000, scoped, tag = 'internal scratch']
  %s0 = inlined_call_operand.vmem [shape: f32[8,256], index: 0, kind: input, shape index: {}]
  %s1 = inlined_call_operand.hbm [shape: f32[1,32], index: 1, kind: input, shape index: {}]
  %s2 = inlined_call_operand.hbm [shape: f32[1,32], index: 2, kind: input, shape index: {}]
  %s3 = inlined_call_operand.vmem [shape: bf16[16,8], index: 3, kind: input, shape index: {}]
  %s4 = inlined_call_operand.vmem [shape: f32[16,1], index: 4, kind: input, shape index: {}]
  %s5 = inlined_call_operand.hbm [shape: bf16[16,16], index: 5, kind: input, shape index: {}]
  %s6 = inlined_call_operand.vmem [shape: f32[16,1], index: 6, kind: input, shape index: {}]
  %s7 = inlined_call_operand.vmem [shape: f32[1,32], index: 7, kind: input, shape index: {}]
  %s8 = inlined_call_operand.vmem [shape: f32[1,32], index: 8, kind: input, shape index: {}]
  %s9 = inlined_call_operand.vmem [shape: bf16[32,64], index: 9, kind: input, shape index: {}]
  %s10 = inlined_call_operand.vmem [shape: f32[1,64], index: 10, kind: input, shape index: {}]
  %s11 = inlined_call_operand.vmem [shape: bf16[64,64], index: 11, kind: input, shape index: {}]
  %s12 = inlined_call_operand.vmem [shape: f32[1,64], index: 12, kind: input, shape index: {}]
  %s13 = inlined_call_operand.hbm [shape: f32[16,512], index: 13, kind: output, shape index: {}]
  %s14 = sld [smem:[#allocation0]]
  $region97: #{tpu_custom_call.1} parent=0
    _
  %s16 = ssub.s32 1, %s14
  %s17 = scalar_select 0, %s16, %s14
  $region1: #{tpu_custom_call.1} parent=0
    #allocation2 [shape = 'u8[512]{0}', space=vmem, size = 0x400, scoped, tag = 'input window, operand 1, single buffered']
    #allocation3 [shape = 's32[2]{0}', space=sflag, size = 0x8, scoped, tag = 'scoped memory for tpu_custom_call.1']
    #allocation4 [shape = 's32[2]{0}', space=sflag, size = 0x8, scoped, tag = 'scoped memory for tpu_custom_call.1']
    #allocation5 [shape = 'u8[512]{0}', space=vmem, size = 0x400, scoped, tag = 'input window, operand 2, single buffered']
    #allocation6 [shape = 's32[1]{0}', space=sflag, size = 0x4, scoped, tag = 'scoped memory for tpu_custom_call.1']
    #allocation7 [shape = 'u8[4096]{0}', space=vmem, size = 0x1000, scoped, tag = 'input window, operand 5, single buffered']
    #allocation8 [shape = 'u8[32768]{0}', space=vmem, size = 0x8000, scoped, tag = 'output window, operand 0']
    %18 = vsyncpa [#allocation3], 0
    %19 = vsyncpa [#allocation6], 0
    %20 = vsyncpa [#allocation4], 0
    %s21 = scalar_lea.sflag [#allocation4], 1
    %22 = vsyncpa %s21, 0
    loop: start=0, step=1, limit=4
    $region2: #{tpu_custom_call.1} parent=1 // loop_pre_header
      _
    $region3: #{tpu_custom_call.1} parent=1 // loop_header
      %s24 = sphi 0, %s28
      %p25 = scmp.ge.s32.totalorder %s24, 4
      %s34 = sphi 0, %s36
      %s37 = sphi 0, %s34
      %s38 = sphi 0, %s37
      %s54 = sphi 0, %s38
      %s58 = sphi 0, %s58
      %s60 = sphi 0, %s58
      %s61 = sphi 0, %s60
      %s75 = sphi 0, %s61
      %s79 = sphi 0, %s79
      %s81 = sphi 0, %s79
      %s82 = sphi 0, %s81
      %s96 = sphi 0, %s82
      %s100 = sphi 0, %s100
      %s102 = sphi 0, %s100
      %s103 = sphi 0, %s102
      %s117 = sphi 0, %s103
      %s121 = sphi 0, %s121
      %s123 = sphi 0, %s121
      %s124 = sphi 0, %s123
      %s138 = sphi 0, %s124
      %s142 = sphi 0, %s142
      %s144 = sphi 0, %s142
      %s145 = sphi 0, %s144
      %s159 = sphi 0, %s145
      %s163 = sphi 0, %s163
      %s165 = sphi 0, %s163
      %s166 = sphi 0, %s165
      %s180 = sphi 0, %s166
      %s184 = sphi 0, %s184
      %s186 = sphi 0, %s184
      %s187 = sphi 0, %s186
      %s201 = sphi 0, %s187
      %s205 = sphi 0, %s205
      %s207 = sphi 0, %s205
      %s208 = sphi 0, %s207
      %s222 = sphi 0, %s208
      %s226 = sphi 0, %s226
      %s228 = sphi 0, %s226
      %s229 = sphi 0, %s228
      %s243 = sphi 0, %s229
      %s247 = sphi 0, %s247
      %s249 = sphi 0, %s247
      %s250 = sphi 0, %s249
      %s264 = sphi 0, %s250
      %s268 = sphi 0, %s268
      %s270 = sphi 0, %s268
      %s271 = sphi 0, %s270
      %s285 = sphi 0, %s271
      %s289 = sphi 0, %s289
      %s291 = sphi 0, %s289
      %s292 = sphi 0, %s291
      %s306 = sphi 0, %s292
      %s312 = sphi 0, %s314
      %s315 = sphi 0, %s312
      %s316 = sphi 0, %s315
      %s332 = sphi 0, %s316
    $region4: #{tpu_custom_call.1} parent=1 // loop_header_branch
      %27 = sbr.rel (%p25) target = $region8
    $region5: #{tpu_custom_call.1} parent=1 // loop_body
      %s29 = ssub.s32 %s24, 1
      %s30 = ssub.s32 %s24, 2
      %s31 = sadd.s32 %s24, 1
      %s32 = ssub.s32 %s24, %s31
      %p33 = scmp.eq.s32.totalorder %s32, 0
      %s35 = sadd.s32 %s34, 1
      %s36 = scalar_select %p33, %s34, %s35
      %p39 = pneg %p33
      %p40 = scmp.eq.s32.totalorder %s24, 1
      %p41 = por %p39, %p40
      %p42 = scmp.ne.s32.totalorder %s34, %s37
      %p43 = scmp.eq.s32.totalorder %s24, 0
      %p44 = por %p42, %p43
      %p45 = scmp.ne.s32.totalorder %s34, %s37
      %p46 = scmp.eq.s32.totalorder %s29, 1
      %p47 = por %p45, %p46
      %p48 = scmp.ne.s32.totalorder %s37, %s38
      %p49 = scmp.eq.s32.totalorder %s29, 0
      %p50 = por %p48, %p49
      %p51 = scmp.ne.s32.totalorder %s37, %s38
      %p52 = scmp.eq.s32.totalorder %s30, 1
      %p53 = por %p51, %p52
      %p55 = scmp.ne.s32.totalorder %s38, %s54
      %p56 = scmp.eq.s32.totalorder %s30, 0
      %p57 = por %p55, %p56
      %s59 = sadd.s32 %s58, 1
      %p62 = scmp.eq.s32.totalorder %s24, 1
      %p63 = scmp.ne.s32.totalorder %s58, %s60
      %p64 = scmp.eq.s32.totalorder %s24, 0
      %p65 = por %p63, %p64
      %p66 = scmp.ne.s32.totalorder %s58, %s60
      %p67 = scmp.eq.s32.totalorder %s29, 1
      %p68 = por %p66, %p67
      %p69 = scmp.ne.s32.totalorder %s60, %s61
      %p70 = scmp.eq.s32.totalorder %s29, 0
      %p71 = por %p69, %p70
      %p72 = scmp.ne.s32.totalorder %s60, %s61
      %p73 = scmp.eq.s32.totalorder %s30, 1
      %p74 = por %p72, %p73
      %p76 = scmp.ne.s32.totalorder %s61, %s75
      %p77 = scmp.eq.s32.totalorder %s30, 0
      %p78 = por %p76, %p77
      %s80 = sadd.s32 %s79, 1
      %p83 = scmp.eq.s32.totalorder %s24, 1
      %p84 = scmp.ne.s32.totalorder %s79, %s81
      %p85 = scmp.eq.s32.totalorder %s24, 0
      %p86 = por %p84, %p85
      %p87 = scmp.ne.s32.totalorder %s79, %s81
      %p88 = scmp.eq.s32.totalorder %s29, 1
      %p89 = por %p87, %p88
      %p90 = scmp.ne.s32.totalorder %s81, %s82
      %p91 = scmp.eq.s32.totalorder %s29, 0
      %p92 = por %p90, %p91
      %p93 = scmp.ne.s32.totalorder %s81, %s82
      %p94 = scmp.eq.s32.totalorder %s30, 1
      %p95 = por %p93, %p94
      %p97 = scmp.ne.s32.totalorder %s82, %s96
      %p98 = scmp.eq.s32.totalorder %s30, 0
      %p99 = por %p97, %p98
      %s101 = sadd.s32 %s100, 1
      %p104 = scmp.eq.s32.totalorder %s24, 1
      %p105 = scmp.ne.s32.totalorder %s100, %s102
      %p106 = scmp.eq.s32.totalorder %s24, 0
      %p107 = por %p105, %p106
      %p108 = scmp.ne.s32.totalorder %s100, %s102
      %p109 = scmp.eq.s32.totalorder %s29, 1
      %p110 = por %p108, %p109
      %p111 = scmp.ne.s32.totalorder %s102, %s103
      %p112 = scmp.eq.s32.totalorder %s29, 0
      %p113 = por %p111, %p112
      %p114 = scmp.ne.s32.totalorder %s102, %s103
      %p115 = scmp.eq.s32.totalorder %s30, 1
      %p116 = por %p114, %p115
      %p118 = scmp.ne.s32.totalorder %s103, %s117
      %p119 = scmp.eq.s32.totalorder %s30, 0
      %p120 = por %p118, %p119
      %s122 = sadd.s32 %s121, 1
      %p125 = scmp.eq.s32.totalorder %s24, 1
      %p126 = scmp.ne.s32.totalorder %s121, %s123
      %p127 = scmp.eq.s32.totalorder %s24, 0
      %p128 = por %p126, %p127
      %p129 = scmp.ne.s32.totalorder %s121, %s123
      %p130 = scmp.eq.s32.totalorder %s29, 1
      %p131 = por %p129, %p130
      %p132 = scmp.ne.s32.totalorder %s123, %s124
      %p133 = scmp.eq.s32.totalorder %s29, 0
      %p134 = por %p132, %p133
      %p135 = scmp.ne.s32.totalorder %s123, %s124
      %p136 = scmp.eq.s32.totalorder %s30, 1
      %p137 = por %p135, %p136
      %p139 = scmp.ne.s32.totalorder %s124, %s138
      %p140 = scmp.eq.s32.totalorder %s30, 0
      %p141 = por %p139, %p140
      %s143 = sadd.s32 %s142, 1
      %p146 = scmp.eq.s32.totalorder %s24, 1
      %p147 = scmp.ne.s32.totalorder %s142, %s144
      %p148 = scmp.eq.s32.totalorder %s24, 0
      %p149 = por %p147, %p148
      %p150 = scmp.ne.s32.totalorder %s142, %s144
      %p151 = scmp.eq.s32.totalorder %s29, 1
      %p152 = por %p150, %p151
      %p153 = scmp.ne.s32.totalorder %s144, %s145
      %p154 = scmp.eq.s32.totalorder %s29, 0
      %p155 = por %p153, %p154
      %p156 = scmp.ne.s32.totalorder %s144, %s145
      %p157 = scmp.eq.s32.totalorder %s30, 1
      %p158 = por %p156, %p157
      %p160 = scmp.ne.s32.totalorder %s145, %s159
      %p161 = scmp.eq.s32.totalorder %s30, 0
      %p162 = por %p160, %p161
      %s164 = sadd.s32 %s163, 1
      %p167 = scmp.eq.s32.totalorder %s24, 1
      %p168 = scmp.ne.s32.totalorder %s163, %s165
      %p169 = scmp.eq.s32.totalorder %s24, 0
      %p170 = por %p168, %p169
      %p171 = scmp.ne.s32.totalorder %s163, %s165
      %p172 = scmp.eq.s32.totalorder %s29, 1
      %p173 = por %p171, %p172
      %p174 = scmp.ne.s32.totalorder %s165, %s166
      %p175 = scmp.eq.s32.totalorder %s29, 0
      %p176 = por %p174, %p175
      %p177 = scmp.ne.s32.totalorder %s165, %s166
      %p178 = scmp.eq.s32.totalorder %s30, 1
      %p179 = por %p177, %p178
      %p181 = scmp.ne.s32.totalorder %s166, %s180
      %p182 = scmp.eq.s32.totalorder %s30, 0
      %p183 = por %p181, %p182
      %s185 = sadd.s32 %s184, 1
      %p188 = scmp.eq.s32.totalorder %s24, 1
      %p189 = scmp.ne.s32.totalorder %s184, %s186
      %p190 = scmp.eq.s32.totalorder %s24, 0
      %p191 = por %p189, %p190
      %p192 = scmp.ne.s32.totalorder %s184, %s186
      %p193 = scmp.eq.s32.totalorder %s29, 1
      %p194 = por %p192, %p193
      %p195 = scmp.ne.s32.totalorder %s186, %s187
      %p196 = scmp.eq.s32.totalorder %s29, 0
      %p197 = por %p195, %p196
      %p198 = scmp.ne.s32.totalorder %s186, %s187
      %p199 = scmp.eq.s32.totalorder %s30, 1
      %p200 = por %p198, %p199
      %p202 = scmp.ne.s32.totalorder %s187, %s201
      %p203 = scmp.eq.s32.totalorder %s30, 0
      %p204 = por %p202, %p203
      %s206 = sadd.s32 %s205, 1
      %p209 = scmp.eq.s32.totalorder %s24, 1
      %p210 = scmp.ne.s32.totalorder %s205, %s207
      %p211 = scmp.eq.s32.totalorder %s24, 0
      %p212 = por %p210, %p211
      %p213 = scmp.ne.s32.totalorder %s205, %s207
      %p214 = scmp.eq.s32.totalorder %s29, 1
      %p215 = por %p213, %p214
      %p216 = scmp.ne.s32.totalorder %s207, %s208
      %p217 = scmp.eq.s32.totalorder %s29, 0
      %p218 = por %p216, %p217
      %p219 = scmp.ne.s32.totalorder %s207, %s208
      %p220 = scmp.eq.s32.totalorder %s30, 1
      %p221 = por %p219, %p220
      %p223 = scmp.ne.s32.totalorder %s208, %s222
      %p224 = scmp.eq.s32.totalorder %s30, 0
      %p225 = por %p223, %p224
      %s227 = sadd.s32 %s226, 1
      %p230 = scmp.eq.s32.totalorder %s24, 1
      %p231 = scmp.ne.s32.totalorder %s226, %s228
      %p232 = scmp.eq.s32.totalorder %s24, 0
      %p233 = por %p231, %p232
      %p234 = scmp.ne.s32.totalorder %s226, %s228
      %p235 = scmp.eq.s32.totalorder %s29, 1
      %p236 = por %p234, %p235
      %p237 = scmp.ne.s32.totalorder %s228, %s229
      %p238 = scmp.eq.s32.totalorder %s29, 0
      %p239 = por %p237, %p238
      %p240 = scmp.ne.s32.totalorder %s228, %s229
      %p241 = scmp.eq.s32.totalorder %s30, 1
      %p242 = por %p240, %p241
      %p244 = scmp.ne.s32.totalorder %s229, %s243
      %p245 = scmp.eq.s32.totalorder %s30, 0
      %p246 = por %p244, %p245
      %s248 = sadd.s32 %s247, 1
      %p251 = scmp.eq.s32.totalorder %s24, 1
      %p252 = scmp.ne.s32.totalorder %s247, %s249
      %p253 = scmp.eq.s32.totalorder %s24, 0
      %p254 = por %p252, %p253
      %p255 = scmp.ne.s32.totalorder %s247, %s249
      %p256 = scmp.eq.s32.totalorder %s29, 1
      %p257 = por %p255, %p256
      %p258 = scmp.ne.s32.totalorder %s249, %s250
      %p259 = scmp.eq.s32.totalorder %s29, 0
      %p260 = por %p258, %p259
      %p261 = scmp.ne.s32.totalorder %s249, %s250
      %p262 = scmp.eq.s32.totalorder %s30, 1
      %p263 = por %p261, %p262
      %p265 = scmp.ne.s32.totalorder %s250, %s264
      %p266 = scmp.eq.s32.totalorder %s30, 0
      %p267 = por %p265, %p266
      %s269 = sadd.s32 %s268, 1
      %p272 = scmp.eq.s32.totalorder %s24, 1
      %p273 = scmp.ne.s32.totalorder %s268, %s270
      %p274 = scmp.eq.s32.totalorder %s24, 0
      %p275 = por %p273, %p274
      %p276 = scmp.ne.s32.totalorder %s268, %s270
      %p277 = scmp.eq.s32.totalorder %s29, 1
      %p278 = por %p276, %p277
      %p279 = scmp.ne.s32.totalorder %s270, %s271
      %p280 = scmp.eq.s32.totalorder %s29, 0
      %p281 = por %p279, %p280
      %p282 = scmp.ne.s32.totalorder %s270, %s271
      %p283 = scmp.eq.s32.totalorder %s30, 1
      %p284 = por %p282, %p283
      %p286 = scmp.ne.s32.totalorder %s271, %s285
      %p287 = scmp.eq.s32.totalorder %s30, 0
      %p288 = por %p286, %p287
      %s290 = sadd.s32 %s289, 1
      %p293 = scmp.eq.s32.totalorder %s24, 1
      %p294 = scmp.ne.s32.totalorder %s289, %s291
      %p295 = scmp.eq.s32.totalorder %s24, 0
      %p296 = por %p294, %p295
      %p297 = scmp.ne.s32.totalorder %s289, %s291
      %p298 = scmp.eq.s32.totalorder %s29, 1
      %p299 = por %p297, %p298
      %p300 = scmp.ne.s32.totalorder %s291, %s292
      %p301 = scmp.eq.s32.totalorder %s29, 0
      %p302 = por %p300, %p301
      %p303 = scmp.ne.s32.totalorder %s291, %s292
      %p304 = scmp.eq.s32.totalorder %s30, 1
      %p305 = por %p303, %p304
      %p307 = scmp.ne.s32.totalorder %s292, %s306
      %p308 = scmp.eq.s32.totalorder %s30, 0
      %p309 = por %p307, %p308
      %s310 = ssub.s32 %s24, %s31
      %p311 = scmp.eq.s32.totalorder %s310, 0
      %s313 = sadd.s32 %s312, 1
      %s314 = scalar_select %p311, %s312, %s313
      %p317 = pneg %p311
      %p318 = scmp.eq.s32.totalorder %s24, 1
      %p319 = por %p317, %p318
      %p320 = scmp.ne.s32.totalorder %s312, %s315
      %p321 = scmp.eq.s32.totalorder %s24, 0
      %p322 = por %p320, %p321
      %p323 = scmp.ne.s32.totalorder %s312, %s315
      %p324 = scmp.eq.s32.totalorder %s29, 1
      %p325 = por %p323, %p324
      %p326 = scmp.ne.s32.totalorder %s315, %s316
      %p327 = scmp.eq.s32.totalorder %s29, 0
      %p328 = por %p326, %p327
      %p329 = scmp.ne.s32.totalorder %s315, %s316
      %p330 = scmp.eq.s32.totalorder %s30, 1
      %p331 = por %p329, %p330
      %p333 = scmp.ne.s32.totalorder %s316, %s332
      %p334 = scmp.eq.s32.totalorder %s30, 0
      %p335 = por %p333, %p334
      %p336 = scmp.le.s32.totalorder 1, %s24
      %p337 = scmp.lt.s32.totalorder %s24, 3
      %p338 = pnand %p336, %p337
      %p339 = pneg %p338
      // Predicated region
      $region9: #{tpu_custom_call.1} parent=5 // pred_check
        _
      $region10: #{tpu_custom_call.1} parent=5 // pred_check_branch
        %341 = sbr.rel (%p338) target = $region12
      $region11: #{tpu_custom_call.1} parent=5 // pred_region
        %s342 = ssub.s32 %s24, 1
        // Predicated region
        $region13: #{tpu_custom_call.1} parent=11 // pred_check
          %p343 = pneg %p71
        $region14: #{tpu_custom_call.1} parent=11 // pred_check_branch
          %345 = sbr.rel (%p343) target = $region16
        $region15: #{tpu_custom_call.1} parent=11 // pred_region
          %s347 = ssub.s32 16, 16
          %348 = vsyncadd [#allocation3], %s347
          %s350 = sshll.u32 [#allocation2], 4
          %s351 = int_to_ptr.vmem [resolvable:$true] %s350
          %353 = dma.hbm_to_vmem [thread:$0]  %s1, 16, %s351, [#allocation3]
        $region16: #{tpu_custom_call.1} parent=11 // pred_fallthru
          _
        // Predicated region
        $region17: #{tpu_custom_call.1} parent=11 // pred_check
          %p354 = pneg %p92
        $region18: #{tpu_custom_call.1} parent=11 // pred_check_branch
          %356 = sbr.rel (%p354) target = $region20
        $region19: #{tpu_custom_call.1} parent=11 // pred_region
          %s358 = ssub.s32 16, 16
          %359 = vsyncadd [#allocation6], %s358
          %s361 = sshll.u32 [#allocation5], 4
          %s362 = int_to_ptr.vmem [resolvable:$true] %s361
          %364 = dma.hbm_to_vmem [thread:$0]  %s2, 16, %s362, [#allocation6]
        $region20: #{tpu_custom_call.1} parent=11 // pred_fallthru
          _
        // Predicated region
        $region21: #{tpu_custom_call.1} parent=11 // pred_check
          %p365 = pneg %p113
        $region22: #{tpu_custom_call.1} parent=11 // pred_check_branch
          %367 = sbr.rel (%p365) target = $region24
        $region23: #{tpu_custom_call.1} parent=11 // pred_region
          _
        $region24: #{tpu_custom_call.1} parent=11 // pred_fallthru
          _
        // Predicated region
        $region25: #{tpu_custom_call.1} parent=11 // pred_check
          %p368 = pneg %p134
        $region26: #{tpu_custom_call.1} parent=11 // pred_check_branch
          %370 = sbr.rel (%p368) target = $region28
        $region27: #{tpu_custom_call.1} parent=11 // pred_region
          _
        $region28: #{tpu_custom_call.1} parent=11 // pred_fallthru
          _
        // Predicated region
        $region29: #{tpu_custom_call.1} parent=11 // pred_check
          %p371 = pneg %p155
        $region30: #{tpu_custom_call.1} parent=11 // pred_check_branch
          %373 = sbr.rel (%p371) target = $region32
        $region31: #{tpu_custom_call.1} parent=11 // pred_region
          %s375 = ssub.s32 128, 128
          %376 = vsyncadd [#allocation6], %s375
          %s377 = sshll.u32 [#allocation7], 4
          %s378 = int_to_ptr.vmem [resolvable:$true] %s377
          %383 = dma.hbm_to_vmem [thread:$0]  %s5, 128, %s378, [#allocation6], 64, 64, 4
        $region32: #{tpu_custom_call.1} parent=11 // pred_fallthru
          _
        // Predicated region
        $region33: #{tpu_custom_call.1} parent=11 // pred_check
          %p384 = pneg %p176
        $region34: #{tpu_custom_call.1} parent=11 // pred_check_branch
          %386 = sbr.rel (%p384) target = $region36
        $region35: #{tpu_custom_call.1} parent=11 // pred_region
          _
        $region36: #{tpu_custom_call.1} parent=11 // pred_fallthru
          _
        // Predicated region
        $region37: #{tpu_custom_call.1} parent=11 // pred_check
          %p387 = pneg %p197
        $region38: #{tpu_custom_call.1} parent=11 // pred_check_branch
          %389 = sbr.rel (%p387) target = $region40
        $region39: #{tpu_custom_call.1} parent=11 // pred_region
          _
        $region40: #{tpu_custom_call.1} parent=11 // pred_fallthru
          _
        // Predicated region
        $region41: #{tpu_custom_call.1} parent=11 // pred_check
          %p390 = pneg %p218
        $region42: #{tpu_custom_call.1} parent=11 // pred_check_branch
          %392 = sbr.rel (%p390) target = $region44
        $region43: #{tpu_custom_call.1} parent=11 // pred_region
          _
        $region44: #{tpu_custom_call.1} parent=11 // pred_fallthru
          _
        // Predicated region
        $region45: #{tpu_custom_call.1} parent=11 // pred_check
          %p393 = pneg %p239
        $region46: #{tpu_custom_call.1} parent=11 // pred_check_branch
          %395 = sbr.rel (%p393) target = $region48
        $region47: #{tpu_custom_call.1} parent=11 // pred_region
          _
        $region48: #{tpu_custom_call.1} parent=11 // pred_fallthru
          _
        // Predicated region
        $region49: #{tpu_custom_call.1} parent=11 // pred_check
          %p396 = pneg %p260
        $region50: #{tpu_custom_call.1} parent=11 // pred_check_branch
          %398 = sbr.rel (%p396) target = $region52
        $region51: #{tpu_custom_call.1} parent=11 // pred_region
          _
        $region52: #{tpu_custom_call.1} parent=11 // pred_fallthru
          _
        // Predicated region
        $region53: #{tpu_custom_call.1} parent=11 // pred_check
          %p399 = pneg %p281
        $region54: #{tpu_custom_call.1} parent=11 // pred_check_branch
          %401 = sbr.rel (%p399) target = $region56
        $region55: #{tpu_custom_call.1} parent=11 // pred_region
          _
        $region56: #{tpu_custom_call.1} parent=11 // pred_fallthru
          _
        // Predicated region
        $region57: #{tpu_custom_call.1} parent=11 // pred_check
          %p402 = pneg %p302
        $region58: #{tpu_custom_call.1} parent=11 // pred_check_branch
          %404 = sbr.rel (%p402) target = $region60
        $region59: #{tpu_custom_call.1} parent=11 // pred_region
          _
        $region60: #{tpu_custom_call.1} parent=11 // pred_fallthru
          _
      $region12: #{tpu_custom_call.1} parent=5 // pred_fallthru
        _
      %p405 = scmp.lt.s32.totalorder %s24, 2
      // Predicated region
      $region61: #{tpu_custom_call.1} parent=5 // pred_check
        %p406 = pneg %p405
      $region62: #{tpu_custom_call.1} parent=5 // pred_check_branch
        %408 = sbr.rel (%p406) target = $region64
      $region63: #{tpu_custom_call.1} parent=5 // pred_region
        // Predicated region
        $region65: #{tpu_custom_call.1} parent=63 // pred_check
          %p409 = pneg %p44
        $region66: #{tpu_custom_call.1} parent=63 // pred_check_branch
          %411 = sbr.rel (%p409) target = $region68
        $region67: #{tpu_custom_call.1} parent=63 // pred_region
          %p412 = scmp.lt.s32.totalorder %s24, 1
          %s413 = scalar_select %p412, %s24, 1
          %s414 = smul.addr %s413, 8
          %s415 = scalar_lea.vmem %s0, %s414
        $region68: #{tpu_custom_call.1} parent=63 // pred_fallthru
          _
      $region64: #{tpu_custom_call.1} parent=5 // pred_fallthru
        _
      %p416 = scmp.le.s32.totalorder 1, %s24
      %p417 = scmp.lt.s32.totalorder %s24, 3
      %p418 = pnand %p416, %p417
      %p419 = pneg %p418
      // Predicated region
      $region69: #{tpu_custom_call.1} parent=5 // pred_check
        _
      $region70: #{tpu_custom_call.1} parent=5 // pred_check_branch
        %421 = sbr.rel (%p418) target = $region72
      $region71: #{tpu_custom_call.1} parent=5 // pred_region
        %s422 = ssub.s32 %s24, 1
        // Predicated region
        $region73: #{tpu_custom_call.1} parent=71 // pred_check
          %p423 = pneg %p71
        $region74: #{tpu_custom_call.1} parent=71 // pred_check_branch
          %425 = sbr.rel (%p423) target = $region76
        $region75: #{tpu_custom_call.1} parent=71 // pred_region
          %426 = dma.done [#allocation3], 16
        $region76: #{tpu_custom_call.1} parent=71 // pred_fallthru
          _
        // Predicated region
        $region77: #{tpu_custom_call.1} parent=71 // pred_check
          %p427 = pneg %p92
        $region78: #{tpu_custom_call.1} parent=71 // pred_check_branch
          %429 = sbr.rel (%p427) target = $region80
        $region79: #{tpu_custom_call.1} parent=71 // pred_region
          %430 = dma.done [#allocation6], 16
        $region80: #{tpu_custom_call.1} parent=71 // pred_fallthru
          _
        // Predicated region
        $region81: #{tpu_custom_call.1} parent=71 // pred_check
          %p431 = pneg %p155
        $region82: #{tpu_custom_call.1} parent=71 // pred_check_branch
          %433 = sbr.rel (%p431) target = $region84
        $region83: #{tpu_custom_call.1} parent=71 // pred_region
          %434 = dma.done [#allocation6], 128
        $region84: #{tpu_custom_call.1} parent=71 // pred_fallthru
          _
        %p435 = scmp.lt.s32.totalorder %s29, 1
        %s436 = scalar_select %p435, %s29, 1
        %s437 = smul.addr %s436, 8
        %s438 = scalar_lea.vmem %s0, %s437
        %p439 = pneg %p50
        %p440 = pneg %p47
        %p441 = pneg %p71
        %p442 = pneg %p68
        %p443 = pneg %p92
        %p444 = pneg %p89
        %p445 = pneg %p113
        %p446 = pneg %p110
        %p447 = pneg %p134
        %p448 = pneg %p131
        %p449 = pneg %p155
        %p450 = pneg %p152
        %p451 = pneg %p176
        %p452 = pneg %p173
        %p453 = pneg %p197
        %p454 = pneg %p194
        %p455 = pneg %p218
        %p456 = pneg %p215
        %p457 = pneg %p239
        %p458 = pneg %p236
        %p459 = pneg %p260
        %p460 = pneg %p257
        %p461 = pneg %p281
        %p462 = pneg %p278
        %p463 = pneg %p302
        %p464 = pneg %p299
        %p465 = pneg %p328
        %p466 = pneg %p325
        %s467 = sand.u32 %s315, 1
        %s468 = scalar_lea.sflag [#allocation4], %s467
        %s469 = sand.u32 %s315, 1
        %s470 = smul.addr %s469, 32
        %s471 = scalar_lea.vmem [#allocation8], %s470
        %p472 = scmp.lt.s32.totalorder %s29, 1
        %s473 = scalar_select %p472, %s29, 1
        %s474 = smul.addr %s473, 8
        %s475 = scalar_lea.vmem %s0, %s474
        %s476 = smul.u32 2, %s29
        %v478 = vld [vmem:[%s475] sm:$0xff]
        %v479 = vld [vmem:[#allocation2] sm:$0x1]
        %v480 = vld [vmem:[#allocation5] sm:$0x1]
        %vm481 = vcmask 261120
        %v482 = vsel %vm481, %v478, 0.0
        %483 = vadd.xlane.f32.xlu0 %v482
        %v484 = vpop.xlane.xlu0 %483
        %v485 = vrcp.pop 32.0
        %v486 = vmul.f32 %v484, %v485
        %v487 = vsub.f32 %v478, %v486
        %v488 = vmul.f32 %v487, %v487
        %v489 = vsel %vm481, %v488, 0.0
        %490 = vadd.xlane.f32.xlu0 %v489
        %v491 = vpop.xlane.xlu0 %490
        %v492 = vmul.f32 %v491, %v485
        %v493 = vadd.f32 %v492, 1e-05
        %v494 = vrsqrt.pop %v493
        %v495 = vmul.f32 %v487, %v494
        %v497 = vlaneseq
        %v498 = vshrl.u32 %v497, 7
        %v499 = vsub.s32 0, %v498
        %v500 = vrot.slane %v479, %v499
        %v502 = vmul.f32 %v495, %v500
        %v504 = vlaneseq
        %v505 = vshrl.u32 %v504, 7
        %v506 = vsub.s32 0, %v505
        %v507 = vrot.slane %v480, %v506
        %v509 = vadd.f32 %v502, %v507
        %511 = vrot.lane.b32.xlu0 %v478, 96
        %v512 = vpop.permute.xlu0 %511
        %v514 = vsel %vm481, %v512, 0.0
        %515 = vadd.xlane.f32.xlu0 %v514
        %v516 = vpop.xlane.xlu0 %515
        %v517 = vmul.f32 %v516, %v485
        %v518 = vsub.f32 %v478, %v517
        %v519 = vmul.f32 %v518, %v518
        %521 = vrot.lane.b32.xlu0 %v519, 96
        %v522 = vpop.permute.xlu0 %521
        %v524 = vsel %vm481, %v522, 0.0
        %525 = vadd.xlane.f32.xlu0 %v524
        %v526 = vpop.xlane.xlu0 %525
        %v527 = vmul.f32 %v526, %v485
        %v528 = vadd.f32 %v527, 1e-05
        %v529 = vrsqrt.pop %v528
        %v530 = vmul.f32 %v518, %v529
        %531 = vrot.lane.b32.xlu0 %v500, 32
        %v532 = vpop.permute.xlu0 %531
        %v534 = vmul.f32 %v530, %v532
        %535 = vrot.lane.b32.xlu0 %v507, 32
        %v536 = vpop.permute.xlu0 %535
        %v538 = vadd.f32 %v534, %v536
        %539 = vrot.lane.b32.xlu0 %v478, 64
        %v540 = vpop.permute.xlu0 %539
        %v542 = vsel %vm481, %v540, 0.0
        %543 = vadd.xlane.f32.xlu0 %v542
        %v544 = vpop.xlane.xlu0 %543
        %v545 = vmul.f32 %v544, %v485
        %v546 = vsub.f32 %v478, %v545
        %v547 = vmul.f32 %v546, %v546
        %549 = vrot.lane.b32.xlu0 %v547, 64
        %v550 = vpop.permute.xlu0 %549
        %v552 = vsel %vm481, %v550, 0.0
        %553 = vadd.xlane.f32.xlu0 %v552
        %v554 = vpop.xlane.xlu0 %553
        %v555 = vmul.f32 %v554, %v485
        %v556 = vadd.f32 %v555, 1e-05
        %v557 = vrsqrt.pop %v556
        %v558 = vmul.f32 %v546, %v557
        %559 = vrot.lane.b32.xlu0 %v500, 64
        %v560 = vpop.permute.xlu0 %559
        %v562 = vmul.f32 %v558, %v560
        %563 = vrot.lane.b32.xlu0 %v507, 64
        %v564 = vpop.permute.xlu0 %563
        %v566 = vadd.f32 %v562, %v564
        %567 = vrot.lane.b32.xlu0 %v478, 32
        %v568 = vpop.permute.xlu0 %567
        %v570 = vsel %vm481, %v568, 0.0
        %571 = vadd.xlane.f32.xlu0 %v570
        %v572 = vpop.xlane.xlu0 %571
        %v573 = vmul.f32 %v572, %v485
        %v574 = vsub.f32 %v478, %v573
        %v575 = vmul.f32 %v574, %v574
        %577 = vrot.lane.b32.xlu0 %v575, 32
        %v578 = vpop.permute.xlu0 %577
        %v580 = vsel %vm481, %v578, 0.0
        %581 = vadd.xlane.f32.xlu0 %v580
        %v582 = vpop.xlane.xlu0 %581
        %v583 = vmul.f32 %v582, %v485
        %v584 = vadd.f32 %v583, 1e-05
        %v585 = vrsqrt.pop %v584
        %v586 = vmul.f32 %v574, %v585
        %587 = vrot.lane.b32.xlu0 %v500, 96
        %v588 = vpop.permute.xlu0 %587
        %v590 = vmul.f32 %v586, %v588
        %591 = vrot.lane.b32.xlu0 %v507, 96
        %v592 = vpop.permute.xlu0 %591
        %v594 = vadd.f32 %v590, %v592
        %v595 = vsel %vm481, %v509, %v538
        %vm596 = vcmask 523264
        %v597 = vsel %vm596, %v595, %v566
        %vm598 = vcmask 785408
        %v599 = vsel %vm598, %v597, %v594
        %v600 = vld [vmem:[%s3] sm:$0xf]
        %v601 = vld [vmem:[%s3 + $0x4] sm:$0xf]
        %v602 = vpack.c.bf16 %v599, %v599
        %v603 = vld [vmem:[%s4] sm:$0xff]
        %v604 = vld [vmem:[%s4 + $0x8] sm:$0xff]
        %606 = vset.pattern.permute.xlu0 0
        %607 = vperm.xlu0 %606, %v603
        %v608 = vpop.permute.xlu0 %607
        %611 = vset.pattern.permute.xlu0 0
        %612 = vperm.xlu0 %611, %v604
        %v613 = vpop.permute.xlu0 %612
        %v617 = vunpack.c.l.b16 %v600
        %v618 = vunpack.c.l.b16 %v601
        %v619 = vpack.c.b16 %v618, %v617
        %vm620 = vcmask 64512
        %v622 = vsel %vm620, %v619, 0
        %vm624 = vcmask 1043456
        %v626 = vsel %vm624, %v602, 0
        %628 = vmatprep.subr.bf16.mxu0 0
        %629 = vmatpush1.bf16.msra.mxu0 %v626
        %630 = vmatprep.subr.bf16.mxu0 0
        %631 = vmatpush1.bf16.msra.mxu0 0
        %632 = vmatprep.subr.bf16.mxu0 0
        %633 = vmatpush1.bf16.msra.mxu0 0
        %634 = vmatprep.subr.bf16.mxu0 0
        %635 = vmatpush1.bf16.msra.mxu0 0
        %636 = vmatprep.subr.bf16.mxu0 0
        %637 = vmatpush1.bf16.msra.mxu0 0
        %638 = vmatprep.subr.bf16.mxu0 0
        %639 = vmatpush1.bf16.msra.mxu0 0
        %640 = vmatprep.subr.bf16.mxu0 0
        %641 = vmatpush1.bf16.msra.mxu0 0
        %642 = vmatprep.subr.bf16.mxu0 0
        %643 = vmatpush1.bf16.msra.mxu0 0
        %644 = vmatprep.subr.bf16.mxu0 0
        %645 = vmatpush1.bf16.msra.mxu0 0
        %646 = vmatprep.subr.bf16.mxu0 0
        %647 = vmatpush1.bf16.msra.mxu0 0
        %648 = vmatprep.subr.bf16.mxu0 0
        %649 = vmatpush1.bf16.msra.mxu0 0
        %650 = vmatprep.subr.bf16.mxu0 0
        %651 = vmatpush1.bf16.msra.mxu0 0
        %652 = vmatprep.subr.bf16.mxu0 0
        %653 = vmatpush1.bf16.msra.mxu0 0
        %654 = vmatprep.subr.bf16.mxu0 0
        %655 = vmatpush1.bf16.msra.mxu0 0
        %656 = vmatprep.subr.bf16.mxu0 0
        %657 = vmatpush1.bf16.msra.mxu0 0
        %658 = vmatprep.subr.bf16.mxu0 0
        %659 = vmatpush1.bf16.msra.mxu0 0
        %660 = vmatprep.mubr.bf16.mxu0 0
        %661 = vmatmul.mubr.bf16.gmra.mrb[0].mxu0 %v622
        %v662 = vpop.f32.mrb[0].mxu0
        %v663 = vadd.f32 %v608, %v662
        %v664 = vpop.f32.mrb[0].mxu0
        %v665 = vpop.f32.mrb[0].mxu0
        %v666 = vadd.f32 %v613, %v665
        %v667 = vpop.f32.mrb[0].mxu0
        %668 = vdwg.mxu0
        %v669 = vmul.f32 %v663, 0.5
        %v670 = vmul.f32 %v666, 0.5
        %v671 = vmul.f32 %v663, 0.70710677
        %v672 = vmul.f32 %v666, 0.70710677
        %v673 = verf.f32.pop %v671
        %v674 = verf.f32.pop %v672
        %v675 = vadd.f32 %v673, 1.0
        %v676 = vadd.f32 %v674, 1.0
        %v677 = vmul.f32 %v669, %v675
        %v678 = vmul.f32 %v670, %v676
        %v679 = vld [vmem:[#allocation7] sm:$0xf]
        %v680 = vld [vmem:[#allocation7 + $0x4] sm:$0xf]
        %v681 = vpack.c.bf16 %v678, %v677
        %v682 = vld [vmem:[%s6] sm:$0xff]
        %v683 = vld [vmem:[%s6 + $0x8] sm:$0xff]
        %685 = vset.pattern.permute.xlu0 0
        %686 = vperm.xlu0 %685, %v682
        %v687 = vpop.permute.xlu0 %686
        %690 = vset.pattern.permute.xlu0 0
        %691 = vperm.xlu0 %690, %v683
        %v692 = vpop.permute.xlu0 %691
        %v696 = vunpack.c.l.b16 %v679
        %v697 = vunpack.c.l.b16 %v680
        %v698 = vpack.c.b16 %v697, %v696
        %vm699 = vcmask 130048
        %v701 = vsel %vm699, %v698, 0
        %703 = vmatprep.subr.bf16.mxu0 0
        %704 = vmatpush1.bf16.msra.mxu0 %v681
        %705 = vmatprep.subr.bf16.mxu0 0
        %706 = vmatpush1.bf16.msra.mxu0 0
        %707 = vmatprep.subr.bf16.mxu0 0
        %708 = vmatpush1.bf16.msra.mxu0 0
        %709 = vmatprep.subr.bf16.mxu0 0
        %710 = vmatpush1.bf16.msra.mxu0 0
        %711 = vmatprep.subr.bf16.mxu0 0
        %712 = vmatpush1.bf16.msra.mxu0 0
        %713 = vmatprep.subr.bf16.mxu0 0
        %714 = vmatpush1.bf16.msra.mxu0 0
        %715 = vmatprep.subr.bf16.mxu0 0
        %716 = vmatpush1.bf16.msra.mxu0 0
        %717 = vmatprep.subr.bf16.mxu0 0
        %718 = vmatpush1.bf16.msra.mxu0 0
        %719 = vmatprep.subr.bf16.mxu0 0
        %720 = vmatpush1.bf16.msra.mxu0 0
        %721 = vmatprep.subr.bf16.mxu0 0
        %722 = vmatpush1.bf16.msra.mxu0 0
        %723 = vmatprep.subr.bf16.mxu0 0
        %724 = vmatpush1.bf16.msra.mxu0 0
        %725 = vmatprep.subr.bf16.mxu0 0
        %726 = vmatpush1.bf16.msra.mxu0 0
        %727 = vmatprep.subr.bf16.mxu0 0
        %728 = vmatpush1.bf16.msra.mxu0 0
        %729 = vmatprep.subr.bf16.mxu0 0
        %730 = vmatpush1.bf16.msra.mxu0 0
        %731 = vmatprep.subr.bf16.mxu0 0
        %732 = vmatpush1.bf16.msra.mxu0 0
        %733 = vmatprep.subr.bf16.mxu0 0
        %734 = vmatpush1.bf16.msra.mxu0 0
        %735 = vmatprep.mubr.bf16.mxu0 0
        %736 = vmatmul.mubr.bf16.gmra.mrb[0].mxu0 %v701
        %v737 = vpop.f32.mrb[0].mxu0
        %v738 = vadd.f32 %v687, %v737
        %v739 = vpop.f32.mrb[0].mxu0
        %v740 = vpop.f32.mrb[0].mxu0
        %v741 = vadd.f32 %v692, %v740
        %v742 = vpop.f32.mrb[0].mxu0
        %743 = vdwg.mxu0
        %v744 = vld [vmem:[%s7] sm:$0x1]
        %v745 = vld [vmem:[%s8] sm:$0x1]
        %v746 = vsel %vm481, %v738, 0.0
        %747 = vadd.xlane.f32.xlu0 %v746
        %v748 = vpop.xlane.xlu0 %747
        %v749 = vsel %vm481, %v741, 0.0
        %750 = vadd.xlane.f32.xlu0 %v749
        %v751 = vpop.xlane.xlu0 %750
        %v752 = vmul.f32 %v748, %v485
        %v753 = vmul.f32 %v751, %v485
        %v754 = vsub.f32 %v738, %v752
        %v755 = vsub.f32 %v741, %v753
        %v756 = vmul.f32 %v754, %v754
        %v757 = vmul.f32 %v755, %v755
        %v758 = vsel %vm481, %v756, 0.0
        %759 = vadd.xlane.f32.xlu0 %v758
        %v760 = vpop.xlane.xlu0 %759
        %v761 = vsel %vm481, %v757, 0.0
        %762 = vadd.xlane.f32.xlu0 %v761
        %v763 = vpop.xlane.xlu0 %762
        %v764 = vmul.f32 %v760, %v485
        %v765 = vmul.f32 %v763, %v485
        %v766 = vadd.f32 %v764, 1e-05
        %v767 = vadd.f32 %v765, 1e-05
        %v768 = vrsqrt.pop %v766
        %v769 = vrsqrt.pop %v767
        %v770 = vmul.f32 %v754, %v768
        %v771 = vmul.f32 %v755, %v769
        %v773 = vlaneseq
        %v774 = vshrl.u32 %v773, 7
        %v775 = vsub.s32 0, %v774
        %v776 = vrot.slane %v744, %v775
        %v778 = vmul.f32 %v770, %v776
        %v779 = vmul.f32 %v771, %v776
        %v781 = vlaneseq
        %v782 = vshrl.u32 %v781, 7
        %v783 = vsub.s32 0, %v782
        %v784 = vrot.slane %v745, %v783
        %v786 = vadd.f32 %v778, %v784
        %v787 = vadd.f32 %v779, %v784
        %790 = vrot.lane.b32.xlu0 %v738, 96
        %v791 = vpop.permute.xlu0 %790
        %792 = vrot.lane.b32.xlu0 %v741, 96
        %v793 = vpop.permute.xlu0 %792
        %v796 = vsel %vm481, %v791, 0.0
        %797 = vadd.xlane.f32.xlu0 %v796
        %v798 = vpop.xlane.xlu0 %797
        %v799 = vsel %vm481, %v793, 0.0
        %800 = vadd.xlane.f32.xlu0 %v799
        %v801 = vpop.xlane.xlu0 %800
        %v802 = vmul.f32 %v798, %v485
        %v803 = vmul.f32 %v801, %v485
        %v804 = vsub.f32 %v738, %v802
        %v805 = vsub.f32 %v741, %v803
        %v806 = vmul.f32 %v804, %v804
        %v807 = vmul.f32 %v805, %v805
        %810 = vrot.lane.b32.xlu0 %v806, 96
        %v811 = vpop.permute.xlu0 %810
        %812 = vrot.lane.b32.xlu0 %v807, 96
        %v813 = vpop.permute.xlu0 %812
        %v816 = vsel %vm481, %v811, 0.0
        %817 = vadd.xlane.f32.xlu0 %v816
        %v818 = vpop.xlane.xlu0 %817
        %v819 = vsel %vm481, %v813, 0.0
        %820 = vadd.xlane.f32.xlu0 %v819
        %v821 = vpop.xlane.xlu0 %820
        %v822 = vmul.f32 %v818, %v485
        %v823 = vmul.f32 %v821, %v485
        %v824 = vadd.f32 %v822, 1e-05
        %v825 = vadd.f32 %v823, 1e-05
        %v826 = vrsqrt.pop %v824
        %v827 = vrsqrt.pop %v825
        %v828 = vmul.f32 %v804, %v826
        %v829 = vmul.f32 %v805, %v827
        %830 = vrot.lane.b32.xlu0 %v776, 32
        %v831 = vpop.permute.xlu0 %830
        %v833 = vmul.f32 %v828, %v831
        %v834 = vmul.f32 %v829, %v831
        %835 = vrot.lane.b32.xlu0 %v784, 32
        %v836 = vpop.permute.xlu0 %835
        %v838 = vadd.f32 %v833, %v836
        %v839 = vadd.f32 %v834, %v836
        %840 = vrot.lane.b32.xlu0 %v738, 64
        %v841 = vpop.permute.xlu0 %840
        %842 = vrot.lane.b32.xlu0 %v741, 64
        %v843 = vpop.permute.xlu0 %842
        %v846 = vsel %vm481, %v841, 0.0
        %847 = vadd.xlane.f32.xlu0 %v846
        %v848 = vpop.xlane.xlu0 %847
        %v849 = vsel %vm481, %v843, 0.0
        %850 = vadd.xlane.f32.xlu0 %v849
        %v851 = vpop.xlane.xlu0 %850
        %v852 = vmul.f32 %v848, %v485
        %v853 = vmul.f32 %v851, %v485
        %v854 = vsub.f32 %v738, %v852
        %v855 = vsub.f32 %v741, %v853
        %v856 = vmul.f32 %v854, %v854
        %v857 = vmul.f32 %v855, %v855
        %860 = vrot.lane.b32.xlu0 %v856, 64
        %v861 = vpop.permute.xlu0 %860
        %862 = vrot.lane.b32.xlu0 %v857, 64
        %v863 = vpop.permute.xlu0 %862
        %v866 = vsel %vm481, %v861, 0.0
        %867 = vadd.xlane.f32.xlu0 %v866
        %v868 = vpop.xlane.xlu0 %867
        %v869 = vsel %vm481, %v863, 0.0
        %870 = vadd.xlane.f32.xlu0 %v869
        %v871 = vpop.xlane.xlu0 %870
        %v872 = vmul.f32 %v868, %v485
        %v873 = vmul.f32 %v871, %v485
        %v874 = vadd.f32 %v872, 1e-05
        %v875 = vadd.f32 %v873, 1e-05
        %v876 = vrsqrt.pop %v874
        %v877 = vrsqrt.pop %v875
        %v878 = vmul.f32 %v854, %v876
        %v879 = vmul.f32 %v855, %v877
        %880 = vrot.lane.b32.xlu0 %v776, 64
        %v881 = vpop.permute.xlu0 %880
        %v883 = vmul.f32 %v878, %v881
        %v884 = vmul.f32 %v879, %v881
        %885 = vrot.lane.b32.xlu0 %v784, 64
        %v886 = vpop.permute.xlu0 %885
        %v888 = vadd.f32 %v883, %v886
        %v889 = vadd.f32 %v884, %v886
        %890 = vrot.lane.b32.xlu0 %v738, 32
        %v891 = vpop.permute.xlu0 %890
        %892 = vrot.lane.b32.xlu0 %v741, 32
        %v893 = vpop.permute.xlu0 %892
        %v896 = vsel %vm481, %v891, 0.0
        %897 = vadd.xlane.f32.xlu0 %v896
        %v898 = vpop.xlane.xlu0 %897
        %v899 = vsel %vm481, %v893, 0.0
        %900 = vadd.xlane.f32.xlu0 %v899
        %v901 = vpop.xlane.xlu0 %900
        %v902 = vmul.f32 %v898, %v485
        %v903 = vmul.f32 %v901, %v485
        %v904 = vsub.f32 %v738, %v902
        %v905 = vsub.f32 %v741, %v903
        %v906 = vmul.f32 %v904, %v904
        %v907 = vmul.f32 %v905, %v905
        %910 = vrot.lane.b32.xlu0 %v906, 32
        %v911 = vpop.permute.xlu0 %910
        %912 = vrot.lane.b32.xlu0 %v907, 32
        %v913 = vpop.permute.xlu0 %912
        %v916 = vsel %vm481, %v911, 0.0
        %917 = vadd.xlane.f32.xlu0 %v916
        %v918 = vpop.xlane.xlu0 %917
        %v919 = vsel %vm481, %v913, 0.0
        %920 = vadd.xlane.f32.xlu0 %v919
        %v921 = vpop.xlane.xlu0 %920
        %v922 = vmul.f32 %v918, %v485
        %v923 = vmul.f32 %v921, %v485
        %v924 = vadd.f32 %v922, 1e-05
        %v925 = vadd.f32 %v923, 1e-05
        %v926 = vrsqrt.pop %v924
        %v927 = vrsqrt.pop %v925
        %v928 = vmul.f32 %v904, %v926
        %v929 = vmul.f32 %v905, %v927
        %930 = vrot.lane.b32.xlu0 %v776, 96
        %v931 = vpop.permute.xlu0 %930
        %v933 = vmul.f32 %v928, %v931
        %v934 = vmul.f32 %v929, %v931
        %935 = vrot.lane.b32.xlu0 %v784, 96
        %v936 = vpop.permute.xlu0 %935
        %v938 = vadd.f32 %v933, %v936
        %v939 = vadd.f32 %v934, %v936
        %942 = vrot.lane.b32.xlu0 %v838, 96
        %v943 = vpop.permute.xlu0 %942
        %944 = vrot.lane.b32.xlu0 %v839, 96
        %v945 = vpop.permute.xlu0 %944
        %950 = vrot.lane.b32.xlu0 %v888, 64
        %v951 = vpop.permute.xlu0 %950
        %952 = vrot.lane.b32.xlu0 %v889, 64
        %v953 = vpop.permute.xlu0 %952
        %958 = vrot.lane.b32.xlu0 %v938, 32
        %v959 = vpop.permute.xlu0 %958
        %960 = vrot.lane.b32.xlu0 %v939, 32
        %v961 = vpop.permute.xlu0 %960
        %v964 = vpack.c.bf16 %v787, %v786
        %v965 = vpack.c.bf16 %v945, %v943
        %v966 = vpack.c.bf16 %v953, %v951
        %v967 = vpack.c.bf16 %v961, %v959
        %v968 = vld [vmem:[%s9] sm:$0xf]
        %v969 = vld [vmem:[%s9 + $0x4] sm:$0xf]
        %v970 = vld [vmem:[%s9 + $0x8] sm:$0xf]
        %v971 = vld [vmem:[%s9 + $0xc] sm:$0xf]
        %v972 = vld [vmem:[%s10] sm:$0x1]
        %v974 = vlaneseq
        %v975 = vshrl.u32 %v974, 7
        %v976 = vsub.s32 0, %v975
        %v977 = vrot.slane %v972, %v976
        %v983 = vunpack.c.l.b16 %v968
        %v984 = vunpack.c.l.b16 %v969
        %v985 = vunpack.c.l.b16 %v970
        %v986 = vunpack.c.l.b16 %v971
        %v987 = vpack.c.b16 %v984, %v983
        %v988 = vpack.c.b16 %v986, %v985
        %v992 = vsel %vm481, %v964, 0
        %v995 = vsel %vm481, %v965, 0
        %v998 = vsel %vm481, %v966, 0
        %v1001 = vsel %vm481, %v967, 0
        %1003 = vmatprep.subr.bf16.mxu0 0
        %1004 = vmatpush1.bf16.msra.mxu0 %v987
        %1005 = vmatprep.subr.bf16.mxu0 0
        %1006 = vmatpush1.bf16.msra.mxu0 %v988
        %1007 = vmatprep.subr.bf16.mxu0 0
        %1008 = vmatpush1.bf16.msra.mxu0 0
        %1009 = vmatprep.subr.bf16.mxu0 0
        %1010 = vmatpush1.bf16.msra.mxu0 0
        %1011 = vmatprep.subr.bf16.mxu0 0
        %1012 = vmatpush1.bf16.msra.mxu0 0
        %1013 = vmatprep.subr.bf16.mxu0 0
        %1014 = vmatpush1.bf16.msra.mxu0 0
        %1015 = vmatprep.subr.bf16.mxu0 0
        %1016 = vmatpush1.bf16.msra.mxu0 0
        %1017 = vmatprep.subr.bf16.mxu0 0
        %1018 = vmatpush1.bf16.msra.mxu0 0
        %1019 = vmatprep.subr.bf16.mxu0 0
        %1020 = vmatpush1.bf16.msra.mxu0 0
        %1021 = vmatprep.subr.bf16.mxu0 0
        %1022 = vmatpush1.bf16.msra.mxu0 0
        %1023 = vmatprep.subr.bf16.mxu0 0
        %1024 = vmatpush1.bf16.msra.mxu0 0
        %1025 = vmatprep.subr.bf16.mxu0 0
        %1026 = vmatpush1.bf16.msra.mxu0 0
        %1027 = vmatprep.subr.bf16.mxu0 0
        %1028 = vmatpush1.bf16.msra.mxu0 0
        %1029 = vmatprep.subr.bf16.mxu0 0
        %1030 = vmatpush1.bf16.msra.mxu0 0
        %1031 = vmatprep.subr.bf16.mxu0 0
        %1032 = vmatpush1.bf16.msra.mxu0 0
        %1033 = vmatprep.subr.bf16.mxu0 0
        %1034 = vmatpush1.bf16.msra.mxu0 0
        %1035 = vmatprep.mubr.bf16.mxu0 0
        %1036 = vmatmul.mubr.bf16.gmra.mrb[0].mxu0 %v992
        %v1037 = vpop.f32.mrb[0].mxu0
        %v1038 = vadd.f32 %v977, %v1037
        %v1039 = vpop.f32.mrb[0].mxu0
        %v1040 = vpop.f32.mrb[0].mxu0
        %v1041 = vadd.f32 %v977, %v1040
        %v1042 = vpop.f32.mrb[0].mxu0
        %1043 = vmatprep.mubr.bf16.mxu0 0
        %1044 = vmatmul.mubr.bf16.gmra.mrb[0].mxu0 %v995
        %v1045 = vpop.f32.mrb[0].mxu0
        %v1046 = vadd.f32 %v977, %v1045
        %v1047 = vpop.f32.mrb[0].mxu0
        %v1048 = vpop.f32.mrb[0].mxu0
        %v1049 = vadd.f32 %v977, %v1048
        %v1050 = vpop.f32.mrb[0].mxu0
        %1051 = vmatprep.mubr.bf16.mxu0 0
        %1052 = vmatmul.mubr.bf16.gmra.mrb[0].mxu0 %v998
        %v1053 = vpop.f32.mrb[0].mxu0
        %v1054 = vadd.f32 %v977, %v1053
        %v1055 = vpop.f32.mrb[0].mxu0
        %v1056 = vpop.f32.mrb[0].mxu0
        %v1057 = vadd.f32 %v977, %v1056
        %v1058 = vpop.f32.mrb[0].mxu0
        %1059 = vmatprep.mubr.bf16.mxu0 0
        %1060 = vmatmul.mubr.bf16.gmra.mrb[0].mxu0 %v1001
        %v1061 = vpop.f32.mrb[0].mxu0
        %v1062 = vadd.f32 %v977, %v1061
        %v1063 = vpop.f32.mrb[0].mxu0
        %v1064 = vpop.f32.mrb[0].mxu0
        %v1065 = vadd.f32 %v977, %v1064
        %v1066 = vpop.f32.mrb[0].mxu0
        %1067 = vdwg.mxu0
        %v1068 = vmul.f32 %v1038, 0.5
        %v1069 = vmul.f32 %v1041, 0.5
        %v1070 = vmul.f32 %v1046, 0.5
        %v1071 = vmul.f32 %v1049, 0.5
        %v1072 = vmul.f32 %v1054, 0.5
        %v1073 = vmul.f32 %v1057, 0.5
        %v1074 = vmul.f32 %v1062, 0.5
        %v1075 = vmul.f32 %v1065, 0.5
        %v1076 = vmul.f32 %v1038, 0.044715
        %v1077 = vmul.f32 %v1041, 0.044715
        %v1078 = vmul.f32 %v1046, 0.044715
        %v1079 = vmul.f32 %v1049, 0.044715
        %v1080 = vmul.f32 %v1054, 0.044715
        %v1081 = vmul.f32 %v1057, 0.044715
        %v1082 = vmul.f32 %v1062, 0.044715
        %v1083 = vmul.f32 %v1065, 0.044715
        %v1084 = vmul.f32 %v1076, %v1038
        %v1085 = vmul.f32 %v1077, %v1041
        %v1086 = vmul.f32 %v1078, %v1046
        %v1087 = vmul.f32 %v1079, %v1049
        %v1088 = vmul.f32 %v1080, %v1054
        %v1089 = vmul.f32 %v1081, %v1057
        %v1090 = vmul.f32 %v1082, %v1062
        %v1091 = vmul.f32 %v1083, %v1065
        %v1092 = vmul.f32 %v1084, %v1038
        %v1093 = vmul.f32 %v1085, %v1041
        %v1094 = vmul.f32 %v1086, %v1046
        %v1095 = vmul.f32 %v1087, %v1049
        %v1096 = vmul.f32 %v1088, %v1054
        %v1097 = vmul.f32 %v1089, %v1057
        %v1098 = vmul.f32 %v1090, %v1062
        %v1099 = vmul.f32 %v1091, %v1065
        %v1100 = vadd.f32 %v1038, %v1092
        %v1101 = vadd.f32 %v1041, %v1093
        %v1102 = vadd.f32 %v1046, %v1094
        %v1103 = vadd.f32 %v1049, %v1095
        %v1104 = vadd.f32 %v1054, %v1096
        %v1105 = vadd.f32 %v1057, %v1097
        %v1106 = vadd.f32 %v1062, %v1098
        %v1107 = vadd.f32 %v1065, %v1099
        %v1108 = vmul.f32 %v1100, 0.7978846
        %v1109 = vmul.f32 %v1101, 0.7978846
        %v1110 = vmul.f32 %v1102, 0.7978846
        %v1111 = vmul.f32 %v1103, 0.7978846
        %v1112 = vmul.f32 %v1104, 0.7978846
        %v1113 = vmul.f32 %v1105, 0.7978846
        %v1114 = vmul.f32 %v1106, 0.7978846
        %v1115 = vmul.f32 %v1107, 0.7978846
        %v1116 = vtanh.pop %v1108
        %v1117 = vtanh.pop %v1109
        %v1118 = vtanh.pop %v1110
        %v1119 = vtanh.pop %v1111
        %v1120 = vtanh.pop %v1112
        %v1121 = vtanh.pop %v1113
        %v1122 = vtanh.pop %v1114
        %v1123 = vtanh.pop %v1115
        %v1124 = vadd.f32 %v1116, 1.0
        %v1125 = vadd.f32 %v1117, 1.0
        %v1126 = vadd.f32 %v1118, 1.0
        %v1127 = vadd.f32 %v1119, 1.0
        %v1128 = vadd.f32 %v1120, 1.0
        %v1129 = vadd.f32 %v1121, 1.0
        %v1130 = vadd.f32 %v1122, 1.0
        %v1131 = vadd.f32 %v1123, 1.0
        %v1132 = vmul.f32 %v1068, %v1124
        %v1133 = vmul.f32 %v1069, %v1125
        %v1134 = vmul.f32 %v1070, %v1126
        %v1135 = vmul.f32 %v1071, %v1127
        %v1136 = vmul.f32 %v1072, %v1128
        %v1137 = vmul.f32 %v1073, %v1129
        %v1138 = vmul.f32 %v1074, %v1130
        %v1139 = vmul.f32 %v1075, %v1131
        %v1140 = vpack.c.bf16 %v1133, %v1132
        %v1141 = vpack.c.bf16 %v1135, %v1134
        %v1142 = vpack.c.bf16 %v1137, %v1136
        %v1143 = vpack.c.bf16 %v1139, %v1138
        %v1144 = vld [vmem:[%s11] sm:$0xf]
        %v1145 = vld [vmem:[%s11 + $0x4] sm:$0xf]
        %v1146 = vld [vmem:[%s11 + $0x8] sm:$0xf]
        %v1147 = vld [vmem:[%s11 + $0xc] sm:$0xf]
        %v1148 = vld [vmem:[%s11 + $0x10] sm:$0xf]
        %v1149 = vld [vmem:[%s11 + $0x14] sm:$0xf]
        %v1150 = vld [vmem:[%s11 + $0x18] sm:$0xf]
        %v1151 = vld [vmem:[%s11 + $0x1c] sm:$0xf]
        %v1152 = vld [vmem:[%s12] sm:$0x1]
        %v1154 = vlaneseq
        %v1155 = vshrl.u32 %v1154, 7
        %v1156 = vsub.s32 0, %v1155
        %v1157 = vrot.slane %v1152, %v1156
        %v1167 = vunpack.c.l.b16 %v1144
        %v1168 = vunpack.c.l.b16 %v1145
        %v1169 = vunpack.c.l.b16 %v1146
        %v1170 = vunpack.c.l.b16 %v1147
        %v1171 = vunpack.c.l.b16 %v1148
        %v1172 = vunpack.c.l.b16 %v1149
        %v1173 = vunpack.c.l.b16 %v1150
        %v1174 = vunpack.c.l.b16 %v1151
        %v1175 = vpack.c.b16 %v1168, %v1167
        %v1176 = vpack.c.b16 %v1170, %v1169
        %v1177 = vpack.c.b16 %v1172, %v1171
        %v1178 = vpack.c.b16 %v1174, %v1173
        %v1184 = vsel %vm596, %v1140, 0
        %v1187 = vsel %vm596, %v1141, 0
        %v1190 = vsel %vm596, %v1142, 0
        %v1193 = vsel %vm596, %v1143, 0
        %1195 = vmatprep.subr.bf16.mxu0 0
        %1196 = vmatpush1.bf16.msra.mxu0 %v1175
        %1197 = vmatprep.subr.bf16.mxu0 0
        %1198 = vmatpush1.bf16.msra.mxu0 %v1176
        %1199 = vmatprep.subr.bf16.mxu0 0
        %1200 = vmatpush1.bf16.msra.mxu0 %v1177
        %1201 = vmatprep.subr.bf16.mxu0 0
        %1202 = vmatpush1.bf16.msra.mxu0 %v1178
        %1203 = vmatprep.subr.bf16.mxu0 0
        %1204 = vmatpush1.bf16.msra.mxu0 0
        %1205 = vmatprep.subr.bf16.mxu0 0
        %1206 = vmatpush1.bf16.msra.mxu0 0
        %1207 = vmatprep.subr.bf16.mxu0 0
        %1208 = vmatpush1.bf16.msra.mxu0 0
        %1209 = vmatprep.subr.bf16.mxu0 0
        %1210 = vmatpush1.bf16.msra.mxu0 0
        %1211 = vmatprep.subr.bf16.mxu0 0
        %1212 = vmatpush1.bf16.msra.mxu0 0
        %1213 = vmatprep.subr.bf16.mxu0 0
        %1214 = vmatpush1.bf16.msra.mxu0 0
        %1215 = vmatprep.subr.bf16.mxu0 0
        %1216 = vmatpush1.bf16.msra.mxu0 0
        %1217 = vmatprep.subr.bf16.mxu0 0
        %1218 = vmatpush1.bf16.msra.mxu0 0
        %1219 = vmatprep.subr.bf16.mxu0 0
        %1220 = vmatpush1.bf16.msra.mxu0 0
        %1221 = vmatprep.subr.bf16.mxu0 0
        %1222 = vmatpush1.bf16.msra.mxu0 0
        %1223 = vmatprep.subr.bf16.mxu0 0
        %1224 = vmatpush1.bf16.msra.mxu0 0
        %1225 = vmatprep.subr.bf16.mxu0 0
        %1226 = vmatpush1.bf16.msra.mxu0 0
        %1227 = vmatprep.mubr.bf16.mxu0 0
        %1228 = vmatmul.mubr.bf16.gmra.mrb[0].mxu0 %v1184
        %v1229 = vpop.f32.mrb[0].mxu0
        %v1230 = vadd.f32 %v1157, %v1229
        %v1231 = vpop.f32.mrb[0].mxu0
        %v1232 = vpop.f32.mrb[0].mxu0
        %v1233 = vadd.f32 %v1157, %v1232
        %v1234 = vpop.f32.mrb[0].mxu0
        %1235 = vmatprep.mubr.bf16.mxu0 0
        %1236 = vmatmul.mubr.bf16.gmra.mrb[0].mxu0 %v1187
        %v1237 = vpop.f32.mrb[0].mxu0
        %v1238 = vadd.f32 %v1157, %v1237
        %v1239 = vpop.f32.mrb[0].mxu0
        %v1240 = vpop.f32.mrb[0].mxu0
        %v1241 = vadd.f32 %v1157, %v1240
        %v1242 = vpop.f32.mrb[0].mxu0
        %1243 = vmatprep.mubr.bf16.mxu0 0
        %1244 = vmatmul.mubr.bf16.gmra.mrb[0].mxu0 %v1190
        %v1245 = vpop.f32.mrb[0].mxu0
        %v1246 = vadd.f32 %v1157, %v1245
        %v1247 = vpop.f32.mrb[0].mxu0
        %v1248 = vpop.f32.mrb[0].mxu0
        %v1249 = vadd.f32 %v1157, %v1248
        %v1250 = vpop.f32.mrb[0].mxu0
        %1251 = vmatprep.mubr.bf16.mxu0 0
        %1252 = vmatmul.mubr.bf16.gmra.mrb[0].mxu0 %v1193
        %v1253 = vpop.f32.mrb[0].mxu0
        %v1254 = vadd.f32 %v1157, %v1253
        %v1255 = vpop.f32.mrb[0].mxu0
        %v1256 = vpop.f32.mrb[0].mxu0
        %v1257 = vadd.f32 %v1157, %v1256
        %v1258 = vpop.f32.mrb[0].mxu0
        %1259 = vdwg.mxu0
        %1262 = vrot.lane.b32.xlu0 %v1238, 64
        %v1263 = vpop.permute.xlu0 %1262
        %1264 = vrot.lane.b32.xlu0 %v1241, 64
        %v1265 = vpop.permute.xlu0 %1264
        %1270 = vrot.lane.b32.xlu0 %v1254, 64
        %v1271 = vpop.permute.xlu0 %1270
        %1272 = vrot.lane.b32.xlu0 %v1257, 64
        %v1273 = vpop.permute.xlu0 %1272
        %v1276 = vsel %vm596, %v1230, %v1263
        %v1277 = vsel %vm596, %v1233, %v1265
        %v1278 = vsel %vm596, %v1246, %v1271
        %v1279 = vsel %vm596, %v1249, %v1273
        %1280 = vst [vmem:[%s471] sm:$0xff] %v1276
        %1281 = vst [vmem:[%s471 + $0x8] sm:$0xff] %v1278
        %1282 = vst [vmem:[%s471 + $0x10] sm:$0xff] %v1277
        %1283 = vst [vmem:[%s471 + $0x18] sm:$0xff] %v1279
        %s1284 = sand.u32 %s315, 1
        %s1285 = scalar_lea.sflag [#allocation4], %s1284
        %s1286 = sand.u32 %s315, 1
        %s1287 = smul.addr %s1286, 32
        %s1288 = scalar_lea.vmem [#allocation8], %s1287
        // Predicated region
        $region85: #{tpu_custom_call.1} parent=71 // pred_check
          %p1289 = pneg %p325
        $region86: #{tpu_custom_call.1} parent=71 // pred_check_branch
          %1291 = sbr.rel (%p1289) target = $region88
        $region87: #{tpu_custom_call.1} parent=71 // pred_region
          %s1292 = smul.u32 2, %s29
          %s1294 = ssub.s32 512, 512
          %1295 = vsyncadd %s1285, %s1294
          %s1296 = smul.addr %s1292, 128
          %s1297 = scalar_lea.hbm %s13, %s1296
          %s1298 = sshll.u32 %s1288, 4
          %s1299 = int_to_ptr.vmem [resolvable:$true] %s1298
          %1304 = dma.vmem_to_hbm [thread:$0]  %s1299, 512, %s1297, %s1285, 256, 512, 16
        $region88: #{tpu_custom_call.1} parent=71 // pred_fallthru
          _
      $region72: #{tpu_custom_call.1} parent=5 // pred_fallthru
        _
      %p1305 = scmp.le.s32.totalorder 2, %s24
      // Predicated region
      $region89: #{tpu_custom_call.1} parent=5 // pred_check
        %p1306 = pneg %p1305
      $region90: #{tpu_custom_call.1} parent=5 // pred_check_branch
        %1308 = sbr.rel (%p1306) target = $region92
      $region91: #{tpu_custom_call.1} parent=5 // pred_region
        %s1309 = ssub.s32 %s24, 2
        // Predicated region
        $region93: #{tpu_custom_call.1} parent=91 // pred_check
          %p1310 = pneg %p331
        $region94: #{tpu_custom_call.1} parent=91 // pred_check_branch
          %1312 = sbr.rel (%p1310) target = $region96
        $region95: #{tpu_custom_call.1} parent=91 // pred_region
          %s1313 = sand.u32 %s316, 1
          %s1314 = scalar_lea.sflag [#allocation4], %s1313
          %s1315 = sand.u32 %s316, 1
          %s1316 = smul.addr %s1315, 32
          %s1317 = scalar_lea.vmem [#allocation8], %s1316
          %1318 = dma.done %s1314, 512
        $region96: #{tpu_custom_call.1} parent=91 // pred_fallthru
          _
      $region92: #{tpu_custom_call.1} parent=5 // pred_fallthru
        _
    $region6: #{tpu_custom_call.1} parent=1 // loop_footer
      %s28 = sadd.s32 1, %s24
    $region7: #{tpu_custom_call.1} parent=1 // loop_footer_branch
      %23 = sbr.rel target = $region3
    $region8: #{tpu_custom_call.1} parent=1 // loop_exit
      _
    %1319 = vsyncpa [#allocation3], 1
    %s1320 = scalar_lea.sflag [#allocation3], 1
    %1321 = vsyncpa %s1320, 1
    %1322 = vsyncpa [#allocation6], 1
    %1323 = vsyncpa [#allocation4], 1
    %s1324 = scalar_lea.sflag [#allocation4], 1
    %1325 = vsyncpa %s1324, 1

</llo_original>
